<compile_context>
chip_gen: v6e
topology: v6e:2x2x1
jax: 0.10.0
libtpu: 0.0.40
codegen_flags: <defaults>
</compile_context>

<pallas_src>
import math

import numpy as np
import jax
import jax.numpy as jnp
from jax.experimental import pallas as pl
from jax.experimental.pallas import tpu as pltpu

VOCAB = 5            # nn.Embedding(5, 9) / nn.Linear(9, 5)
VOCAB_SUB = 8        # embedding-table rows padded to one sublane group
VOCAB_PAD = 128      # lane-dense padded vocab width of the kernel output
EMB = 9              # true embedding_dim of the PyTorch module
E_PAD = 128          # lane-padded feature width used inside the kernel
NUM_LAYERS = 4       # len(self.magics)
MAX_SEQ = 128        # max_sequence_length
NEG_BIG = -1e30      # bias for padded vocab columns (f32 exp underflows to 0)
                     # NOTE: invariant only holds for f32 logits.


# ----------------------------- Pallas kernel ------------------------------ #
def _bert_kernel(ids_ref, pos_ref, emb_ref, wqkv_ref, bqkv_ref,
                 wvoc_ref, bvoc_ref, out_ref):
    # ids_ref : (Bt, S) int32          pos_ref : (S, E_PAD)
    # emb_ref : (VOCAB_SUB, E_PAD)     wqkv_ref: (L, E_PAD, 3*E_PAD)
    # bqkv_ref: (L, 1, 3*E_PAD)        wvoc_ref: (E_PAD, VOCAB_PAD)
    # bvoc_ref: (1, VOCAB_PAD)         out_ref : (Bt, S, VOCAB_PAD)
    bt, s = ids_ref.shape
    m = bt * s

    # Embedding gather as a tiny one-hot matmul (only int32 ids cross HBM).
    ids = ids_ref[...]                                                # (Bt,S)
    iota = jax.lax.broadcasted_iota(jnp.int32, (bt, s, VOCAB_SUB), 2)
    one_hot = (iota == ids[:, :, None]).astype(jnp.float32)          # (Bt,S,8)
    x = jnp.einsum("bsv,ve->bse", one_hot, emb_ref[...],
                   preferred_element_type=jnp.float32)
    x = x + pos_ref[...]                                              # (Bt,S,E_PAD)
    # Invariant: columns EMB..E_PAD-1 of x are exactly zero (zero padding of
    # emb/pos/weights/biases), so every padded contraction matches the E=9 math.

    scale = 1.0 / math.sqrt(EMB)          # PyTorch: / sqrt(Q.size(-1)) = sqrt(9)
    for l in range(NUM_LAYERS):           # small static unroll
        # One fused, (B,S)-collapsed projection matmul per layer.
        x2 = x.reshape(m, E_PAD)                                      # layout-free
        qkv = jnp.dot(x2, wqkv_ref[l],
                      preferred_element_type=jnp.float32) + bqkv_ref[l]
        qkv = qkv.reshape(bt, s, 3 * E_PAD)
        q = qkv[..., 0 * E_PAD:1 * E_PAD] * scale     # lane-aligned 128-wide slots
        k = qkv[..., 1 * E_PAD:2 * E_PAD]
        v = qkv[..., 2 * E_PAD:3 * E_PAD]

        scores = jnp.einsum("bqe,bke->bqk", q, k,
                            preferred_element_type=jnp.float32)      # (Bt,S,S)
        scores = scores - jnp.max(scores, axis=-1, keepdims=True)    # stable
        p = jnp.exp(scores)
        rowsum = jnp.sum(p, axis=-1, keepdims=True)                  # (Bt,S,1)
        ctx = jnp.einsum("bqk,bke->bqe", p, v,
                         preferred_element_type=jnp.float32)         # (Bt,S,E_PAD)
        # Deferred softmax normalization on the small context; exact reciprocal
        # (off the critical path, avoids compounding approx error over 4 layers).
        x = ctx * pl.reciprocal(rowsum, approx=False)

    # Vocab projection over the lane-dense padded vocab + log_softmax.
    x2 = x.reshape(m, E_PAD)
    logits = jnp.dot(x2, wvoc_ref[...],
                     preferred_element_type=jnp.float32) + bvoc_ref[...]
    mx = jnp.max(logits, axis=-1, keepdims=True)
    shifted = logits - mx
    lse = jnp.log(jnp.sum(jnp.exp(shifted), axis=-1, keepdims=True))
    out_ref[...] = (shifted - lse).reshape(bt, s, VOCAB_PAD)  # full unmasked vst


# --------------------------- tiling / chip policy -------------------------- #
def _vmem_capacity_bytes():
    try:
        return int(pltpu.get_tpu_info().vmem_capacity_bytes)
    except Exception:
        return 64 << 20        # conservative fallback (v7x per-core physical VMEM)


def _looks_like_v7x():
    try:
        return "7" in jax.devices()[0].device_kind.lower()
    except Exception:
        return False


def _pick_tiling(B, S):
    """VMEM-budgeted batch tile, number of grid steps and vmem limit."""
    vmem_phys = _vmem_capacity_bytes()
    # Rough f32 live-set per batch row inside the kernel: qkv (3*E_PAD),
    # scores + p (2*S), x + ctx (2*E_PAD), padded logits / out (2*VOCAB_PAD).
    per_row_bytes = S * (3 * E_PAD + 2 * S + 2 * E_PAD + 2 * VOCAB_PAD) * 4
    budget = vmem_phys // 2                      # headroom for weights / buffers
    bt_cap = max(1, budget // per_row_bytes)
    if B <= bt_cap:
        bt, steps = B, 1                         # single step: no serial overhead
    else:
        bt = max(8, (bt_cap // 8) * 8)           # keep (Bt,S) ids block sublane-aligned
        steps = pl.cdiv(B, bt)

    weight_bytes = 4 * (S * E_PAD + VOCAB_SUB * E_PAD
                        + NUM_LAYERS * E_PAD * 3 * E_PAD + NUM_LAYERS * 3 * E_PAD
                        + E_PAD * VOCAB_PAD + VOCAB_PAD)
    block_bytes = 2 * 4 * (bt * S + bt * S * VOCAB_PAD)   # double-buffered ids/out
    need = 2 * weight_bytes + block_bytes + bt * per_row_bytes + (4 << 20)
    vmem_limit = int(min(max(need, 16 << 20), int(vmem_phys * 0.75)))
    return bt, steps, vmem_limit


# ------------------------------ wrapper ----------------------------------- #
def bert_forward(token_ids, params):
    B, S = token_ids.shape
    assert S <= MAX_SEQ

    # ---- parameter prep: zero-pad the 9-wide feature dim to lane-dense 128 ----
    pos = jnp.pad(params["pos"][:S, :], ((0, 0), (0, E_PAD - EMB)))          # (S,E_PAD)
    emb = jnp.pad(params["emb"],
                  ((0, VOCAB_SUB - VOCAB), (0, E_PAD - EMB)))                # (8,E_PAD)

    def pad_w(w):   # (L, EMB, EMB) -> (L, E_PAD, E_PAD)
        return jnp.pad(w, ((0, 0), (0, E_PAD - EMB), (0, E_PAD - EMB)))

    def pad_b(b):   # (L, EMB) -> (L, E_PAD)
        return jnp.pad(b, ((0, 0), (0, E_PAD - EMB)))

    wqkv = jnp.concatenate([pad_w(params["wq"]), pad_w(params["wk"]),
                            pad_w(params["wv"])], axis=-1)                   # (L,E_PAD,3E_PAD)
    bqkv = jnp.concatenate([pad_b(params["bq"]), pad_b(params["bk"]),
                            pad_b(params["bv"])], axis=-1)[:, None, :]       # (L,1,3E_PAD)
    # Padded vocab columns get a huge negative bias -> exp underflows to 0 in
    # the log_softmax sums (f32 only).
    wvoc = jnp.pad(params["wvoc"], ((0, E_PAD - EMB), (0, VOCAB_PAD - VOCAB)))
    bvoc = jnp.full((1, VOCAB_PAD), NEG_BIG, jnp.float32).at[:, :VOCAB].set(params["bvoc"])

    # ---- VMEM-budgeted batch tiling + per-generation grid semantics ----
    Bt, num_steps, vmem_limit = _pick_tiling(B, S)
    Bp = Bt * num_steps
    ids = token_ids.astype(jnp.int32)
    if Bp != B:
        ids = jnp.concatenate([ids, jnp.zeros((Bp - B, S), jnp.int32)], axis=0)

    if num_steps == 1:
        dim_sem = ("arbitrary",)                 # 1 step: nothing to parallelize
    elif _looks_like_v7x() and num_steps % 2 == 0:
        dim_sem = (pltpu.CORE_PARALLEL,)         # shard steps across the 2 TCs
    else:
        dim_sem = ("parallel",)

    full = lambda shape: pl.BlockSpec(shape, lambda b, _s=len(shape): (0,) * _s)

    grid_spec = pltpu.PrefetchScalarGridSpec(
        num_scalar_prefetch=0,
        grid=(num_steps,),
        in_specs=[
            pl.BlockSpec((Bt, S), lambda b: (b, 0)),                 # token ids
            full((S, E_PAD)),                                        # pos enc
            full((VOCAB_SUB, E_PAD)),                                # emb table
            full((NUM_LAYERS, E_PAD, 3 * E_PAD)),                    # fused Wqkv
            full((NUM_LAYERS, 1, 3 * E_PAD)),                        # fused bqkv
            full((E_PAD, VOCAB_PAD)),                                # W vocab (padded)
            full((1, VOCAB_PAD)),                                    # b vocab (padded)
        ],
        out_specs=pl.BlockSpec((Bt, S, VOCAB_PAD), lambda b: (b, 0, 0)),
    )

    # Advisory cost hint for XLA's scheduler around this us-scale call.
    m_total = Bp * S
    flops = (2 * m_total * VOCAB_SUB * E_PAD
             + NUM_LAYERS * (2 * m_total * E_PAD * 3 * E_PAD
                             + 2 * Bp * S * S * E_PAD * 2)
             + 2 * m_total * E_PAD * VOCAB_PAD)
    transcendentals = NUM_LAYERS * Bp * S * S + m_total * VOCAB_PAD
    bytes_accessed = 4 * (ids.size + Bp * S * VOCAB_PAD + wqkv.size + bqkv.size
                          + wvoc.size + bvoc.size + emb.size + pos.size)
    cost = pl.CostEstimate(flops=int(flops), transcendentals=int(transcendentals),
                           bytes_accessed=int(bytes_accessed))

    out = pl.pallas_call(
        _bert_kernel,
        out_shape=jax.ShapeDtypeStruct((Bp, S, VOCAB_PAD), jnp.float32),
        grid_spec=grid_spec,
        compiler_params=pltpu.CompilerParams(
            dimension_semantics=dim_sem,
            vmem_limit_bytes=vmem_limit),
        cost_estimate=cost,
    )(ids, pos, emb, wqkv, bqkv, wvoc, bvoc)

    # Strip batch padding and the lane padding of the vocab axis.
    # TODO(synk): for very large B*S, emit the output as (Bt, 8, S) (vocab on
    # sublanes) to cut output HBM traffic ~16x; not needed at these sizes.
    return out[:B, :, :VOCAB]


# ------------------------- deterministic params --------------------------- #
def make_params(key):
    ks = jax.random.split(key, 10)
    scale = 0.1

    # positional encoding matrix (matches the double loop in BERT.__init__)
    pos = np.zeros((MAX_SEQ, EMB), dtype=np.float32)
    for position in range(MAX_SEQ):
        for dimension in range(EMB):
            angle_rate = position / 10000 ** (2 * (dimension // 2) / EMB)
            pos[position, dimension] = math.sin(angle_rate) if dimension % 2 == 0 else math.cos(angle_rate)

    # Linear weights are stored directly in (in, out) layout (synthetic init).
    return {
        "emb": scale * jax.random.normal(ks[0], (VOCAB, EMB), jnp.float32),
        "pos": jnp.asarray(pos),
        "wq": scale * jax.random.normal(ks[1], (NUM_LAYERS, EMB, EMB), jnp.float32),
        "bq": scale * jax.random.normal(ks[2], (NUM_LAYERS, EMB), jnp.float32),
        "wk": scale * jax.random.normal(ks[3], (NUM_LAYERS, EMB, EMB), jnp.float32),
        "bk": scale * jax.random.normal(ks[4], (NUM_LAYERS, EMB), jnp.float32),
        "wv": scale * jax.random.normal(ks[5], (NUM_LAYERS, EMB, EMB), jnp.float32),
        "bv": scale * jax.random.normal(ks[6], (NUM_LAYERS, EMB), jnp.float32),
        "wvoc": scale * jax.random.normal(ks[7], (EMB, VOCAB), jnp.float32),
        "bvoc": scale * jax.random.normal(ks[8], (1, VOCAB), jnp.float32),
    }


# --------------------------- pure-JAX reference ---------------------------- #
def bert_reference(token_ids, params):
    B, S = token_ids.shape
    x = params["emb"][token_ids] + params["pos"][:S, :]
    for l in range(NUM_LAYERS):
        q = x @ params["wq"][l] + params["bq"][l]
        k = x @ params["wk"][l] + params["bk"][l]
        v = x @ params["wv"][l] + params["bv"][l]
        s = jnp.einsum("bqe,bke->bqk", q, k) / math.sqrt(EMB)
        p = jax.nn.softmax(s, axis=-1)
        x = jnp.einsum("bqk,bke->bqe", p, v)
    logits = x @ params["wvoc"] + params["bvoc"][0]
    return jax.nn.log_softmax(logits, axis=-1)


if __name__ == "__main__":
    key = jax.random.PRNGKey(0)
    params = make_params(key)

    B, S = 2, 8
    token_ids = jax.random.randint(jax.random.PRNGKey(1), (B, S), 0, VOCAB, dtype=jnp.int32)

    out = bert_forward(token_ids, params)
    out = jax.block_until_ready(out)

    ref = bert_reference(token_ids, params)
    np.testing.assert_allclose(np.asarray(out), np.asarray(ref), atol=1e-4, rtol=1e-4)

    print("KERNEL_OK")
</pallas_src>

<mosaic_0001>
module attributes {stable_mosaic.version = 11 : i64} {
  func.func @_bert_kernel(%arg0: i32, %arg1: memref<2x8xi32, #tpu.memory_space<vmem>>, %arg2: memref<8x128xf32, #tpu.memory_space<vmem>>, %arg3: memref<8x128xf32, #tpu.memory_space<vmem>>, %arg4: memref<4x128x384xf32, #tpu.memory_space<vmem>>, %arg5: memref<4x1x384xf32, #tpu.memory_space<vmem>>, %arg6: memref<128x128xf32, #tpu.memory_space<vmem>>, %arg7: memref<1x128xf32, #tpu.memory_space<vmem>>, %arg8: memref<2x8x128xf32, #tpu.memory_space<vmem>>) attributes {dimension_semantics = [#tpu.dimension_semantics<arbitrary>], iteration_bounds = array<i64: 1>, scalar_prefetch = 0 : i64, scratch_operands = 0 : i64, tpu.core_type = #tpu.core_type<tc>, window_params = [{transform_indices = @transform_0, window_bounds = array<i64: 2, 8>}, {pipeline_mode = #tpu.pipeline_mode<synchronous>, transform_indices = @transform_1, window_bounds = array<i64: 8, 128>}, {pipeline_mode = #tpu.pipeline_mode<synchronous>, transform_indices = @transform_2, window_bounds = array<i64: 8, 128>}, {pipeline_mode = #tpu.pipeline_mode<synchronous>, transform_indices = @transform_3, window_bounds = array<i64: 4, 128, 384>}, {pipeline_mode = #tpu.pipeline_mode<synchronous>, transform_indices = @transform_4, window_bounds = array<i64: 4, 1, 384>}, {pipeline_mode = #tpu.pipeline_mode<synchronous>, transform_indices = @transform_5, window_bounds = array<i64: 128, 128>}, {pipeline_mode = #tpu.pipeline_mode<synchronous>, transform_indices = @transform_6, window_bounds = array<i64: 1, 128>}, {transform_indices = @transform_7, window_bounds = array<i64: 2, 8, 128>}]} {
    %c0 = arith.constant 0 : index
    %c0_0 = arith.constant 0 : index
    %0 = vector.load %arg1[%c0, %c0_0] : memref<2x8xi32, #tpu.memory_space<vmem>>, vector<2x8xi32>
    %1 = tpu.iota {dimensions = array<i32: 2>} : vector<2x8x8xi32>
    %2 = vector.shape_cast %0 : vector<2x8xi32> to vector<2x8x1xi32>
    %3 = vector.broadcast %2 : vector<2x8x1xi32> to vector<2x8x8xi32>
    %4 = arith.cmpi eq, %1, %3 : vector<2x8x8xi32>
    %5 = arith.extui %4 : vector<2x8x8xi1> to vector<2x8x8xi32>
    %6 = arith.sitofp %5 : vector<2x8x8xi32> to vector<2x8x8xf32>
    %c0_1 = arith.constant 0 : index
    %c0_2 = arith.constant 0 : index
    %7 = vector.load %arg3[%c0_1, %c0_2] : memref<8x128xf32, #tpu.memory_space<vmem>>, vector<8x128xf32>
    "tpu.trace_start"() <{level = 10 : i32, message = "bsv,ve->bse"}> : () -> ()
    %cst = arith.constant dense<0.000000e+00> : vector<2x8x128xf32>
    %8 = tpu.matmul %6, %7, %cst {dimension_numbers = #tpu.dot_dimension_numbers<[2], [0], [0, 1], [1], [0, 0, 0, 1, 1, 1], [], []>} : vector<2x8x8xf32>, vector<8x128xf32>, vector<2x8x128xf32> -> vector<2x8x128xf32>
    "tpu.trace_stop"() : () -> ()
    %c0_3 = arith.constant 0 : index
    %c0_4 = arith.constant 0 : index
    %9 = vector.load %arg2[%c0_3, %c0_4] : memref<8x128xf32, #tpu.memory_space<vmem>>, vector<8x128xf32>
    %10 = vector.shape_cast %9 : vector<8x128xf32> to vector<1x8x128xf32>
    %11 = vector.broadcast %10 : vector<1x8x128xf32> to vector<2x8x128xf32>
    %12 = arith.addf %8, %11 : vector<2x8x128xf32>
    %13 = vector.shape_cast %12 : vector<2x8x128xf32> to vector<16x128xf32>
    %c0_5 = arith.constant 0 : index
    %c0_6 = arith.constant 0 : index
    %c0_7 = arith.constant 0 : index
    %14 = vector.load %arg4[%c0_5, %c0_6, %c0_7] : memref<4x128x384xf32, #tpu.memory_space<vmem>>, vector<1x128x384xf32>
    %15 = vector.shape_cast %14 : vector<1x128x384xf32> to vector<128x384xf32>
    %cst_8 = arith.constant dense<0.000000e+00> : vector<16x384xf32>
    %16 = tpu.matmul %13, %15, %cst_8 {dimension_numbers = #tpu.dot_dimension_numbers<[1], [0], [0], [1], [0, 0, 1, 1], [], []>} : vector<16x128xf32>, vector<128x384xf32>, vector<16x384xf32> -> vector<16x384xf32>
    %c0_9 = arith.constant 0 : index
    %c0_10 = arith.constant 0 : index
    %c0_11 = arith.constant 0 : index
    %17 = vector.load %arg5[%c0_9, %c0_10, %c0_11] : memref<4x1x384xf32, #tpu.memory_space<vmem>>, vector<1x1x384xf32>
    %18 = vector.shape_cast %17 : vector<1x1x384xf32> to vector<1x384xf32>
    %19 = vector.broadcast %18 : vector<1x384xf32> to vector<16x384xf32>
    %20 = arith.addf %16, %19 : vector<16x384xf32>
    %21 = vector.shape_cast %20 : vector<16x384xf32> to vector<2x8x384xf32>
    %22 = vector.extract_strided_slice %21 {offsets = [0, 0, 0], sizes = [2, 8, 128], strides = [1, 1, 1]} : vector<2x8x384xf32> to vector<2x8x128xf32>
    %cst_12 = arith.constant 0.333333343 : f32
    %23 = vector.broadcast %cst_12 : f32 to vector<2x8x128xf32>
    %24 = arith.mulf %22, %23 : vector<2x8x128xf32>
    %25 = vector.extract_strided_slice %21 {offsets = [0, 0, 128], sizes = [2, 8, 128], strides = [1, 1, 1]} : vector<2x8x384xf32> to vector<2x8x128xf32>
    %26 = vector.extract_strided_slice %21 {offsets = [0, 0, 256], sizes = [2, 8, 128], strides = [1, 1, 1]} : vector<2x8x384xf32> to vector<2x8x128xf32>
    "tpu.trace_start"() <{level = 10 : i32, message = "bqe,bke->bqk"}> : () -> ()
    %cst_13 = arith.constant dense<0.000000e+00> : vector<2x8x8xf32>
    %27 = tpu.matmul %24, %25, %cst_13 {dimension_numbers = #tpu.dot_dimension_numbers<[2], [2], [1], [1], [0, 0, 0, 1, 1, 1], [0], [0]>} : vector<2x8x128xf32>, vector<2x8x128xf32>, vector<2x8x8xf32> -> vector<2x8x8xf32>
    "tpu.trace_stop"() : () -> ()
    %cst_14 = arith.constant dense<0xFF800000> : vector<2x8xf32>
    %28 = vector.multi_reduction <maximumf>, %27, %cst_14 [2] : vector<2x8x8xf32> to vector<2x8xf32>
    %29 = vector.shape_cast %28 : vector<2x8xf32> to vector<2x8x1xf32>
    %30 = vector.broadcast %29 : vector<2x8x1xf32> to vector<2x8x8xf32>
    %31 = arith.subf %27, %30 : vector<2x8x8xf32>
    %32 = math.exp %31 : vector<2x8x8xf32>
    %cst_15 = arith.constant dense<0.000000e+00> : vector<2x8xf32>
    %33 = vector.multi_reduction <add>, %32, %cst_15 [2] : vector<2x8x8xf32> to vector<2x8xf32>
    %34 = vector.shape_cast %33 : vector<2x8xf32> to vector<2x8x1xf32>
    "tpu.trace_start"() <{level = 10 : i32, message = "bqk,bke->bqe"}> : () -> ()
    %cst_16 = arith.constant dense<0.000000e+00> : vector<2x8x128xf32>
    %35 = tpu.matmul %32, %26, %cst_16 {dimension_numbers = #tpu.dot_dimension_numbers<[2], [1], [1], [2], [0, 0, 0, 1, 1, 2], [0], [0]>} : vector<2x8x8xf32>, vector<2x8x128xf32>, vector<2x8x128xf32> -> vector<2x8x128xf32>
    "tpu.trace_stop"() : () -> ()
    %36 = tpu.reciprocal %34 : vector<2x8x1xf32> -> vector<2x8x1xf32>
    %37 = vector.broadcast %36 : vector<2x8x1xf32> to vector<2x8x128xf32>
    %38 = arith.mulf %35, %37 : vector<2x8x128xf32>
    %39 = vector.shape_cast %38 : vector<2x8x128xf32> to vector<16x128xf32>
    %c1 = arith.constant 1 : index
    %c0_17 = arith.constant 0 : index
    %c0_18 = arith.constant 0 : index
    %40 = vector.load %arg4[%c1, %c0_17, %c0_18] : memref<4x128x384xf32, #tpu.memory_space<vmem>>, vector<1x128x384xf32>
    %41 = vector.shape_cast %40 : vector<1x128x384xf32> to vector<128x384xf32>
    %cst_19 = arith.constant dense<0.000000e+00> : vector<16x384xf32>
    %42 = tpu.matmul %39, %41, %cst_19 {dimension_numbers = #tpu.dot_dimension_numbers<[1], [0], [0], [1], [0, 0, 1, 1], [], []>} : vector<16x128xf32>, vector<128x384xf32>, vector<16x384xf32> -> vector<16x384xf32>
    %c1_20 = arith.constant 1 : index
    %c0_21 = arith.constant 0 : index
    %c0_22 = arith.constant 0 : index
    %43 = vector.load %arg5[%c1_20, %c0_21, %c0_22] : memref<4x1x384xf32, #tpu.memory_space<vmem>>, vector<1x1x384xf32>
    %44 = vector.shape_cast %43 : vector<1x1x384xf32> to vector<1x384xf32>
    %45 = vector.broadcast %44 : vector<1x384xf32> to vector<16x384xf32>
    %46 = arith.addf %42, %45 : vector<16x384xf32>
    %47 = vector.shape_cast %46 : vector<16x384xf32> to vector<2x8x384xf32>
    %48 = vector.extract_strided_slice %47 {offsets = [0, 0, 0], sizes = [2, 8, 128], strides = [1, 1, 1]} : vector<2x8x384xf32> to vector<2x8x128xf32>
    %cst_23 = arith.constant 0.333333343 : f32
    %49 = vector.broadcast %cst_23 : f32 to vector<2x8x128xf32>
    %50 = arith.mulf %48, %49 : vector<2x8x128xf32>
    %51 = vector.extract_strided_slice %47 {offsets = [0, 0, 128], sizes = [2, 8, 128], strides = [1, 1, 1]} : vector<2x8x384xf32> to vector<2x8x128xf32>
    %52 = vector.extract_strided_slice %47 {offsets = [0, 0, 256], sizes = [2, 8, 128], strides = [1, 1, 1]} : vector<2x8x384xf32> to vector<2x8x128xf32>
    "tpu.trace_start"() <{level = 10 : i32, message = "bqe,bke->bqk"}> : () -> ()
    %cst_24 = arith.constant dense<0.000000e+00> : vector<2x8x8xf32>
    %53 = tpu.matmul %50, %51, %cst_24 {dimension_numbers = #tpu.dot_dimension_numbers<[2], [2], [1], [1], [0, 0, 0, 1, 1, 1], [0], [0]>} : vector<2x8x128xf32>, vector<2x8x128xf32>, vector<2x8x8xf32> -> vector<2x8x8xf32>
    "tpu.trace_stop"() : () -> ()
    %cst_25 = arith.constant dense<0xFF800000> : vector<2x8xf32>
    %54 = vector.multi_reduction <maximumf>, %53, %cst_25 [2] : vector<2x8x8xf32> to vector<2x8xf32>
    %55 = vector.shape_cast %54 : vector<2x8xf32> to vector<2x8x1xf32>
    %56 = vector.broadcast %55 : vector<2x8x1xf32> to vector<2x8x8xf32>
    %57 = arith.subf %53, %56 : vector<2x8x8xf32>
    %58 = math.exp %57 : vector<2x8x8xf32>
    %cst_26 = arith.constant dense<0.000000e+00> : vector<2x8xf32>
    %59 = vector.multi_reduction <add>, %58, %cst_26 [2] : vector<2x8x8xf32> to vector<2x8xf32>
    %60 = vector.shape_cast %59 : vector<2x8xf32> to vector<2x8x1xf32>
    "tpu.trace_start"() <{level = 10 : i32, message = "bqk,bke->bqe"}> : () -> ()
    %cst_27 = arith.constant dense<0.000000e+00> : vector<2x8x128xf32>
    %61 = tpu.matmul %58, %52, %cst_27 {dimension_numbers = #tpu.dot_dimension_numbers<[2], [1], [1], [2], [0, 0, 0, 1, 1, 2], [0], [0]>} : vector<2x8x8xf32>, vector<2x8x128xf32>, vector<2x8x128xf32> -> vector<2x8x128xf32>
    "tpu.trace_stop"() : () -> ()
    %62 = tpu.reciprocal %60 : vector<2x8x1xf32> -> vector<2x8x1xf32>
    %63 = vector.broadcast %62 : vector<2x8x1xf32> to vector<2x8x128xf32>
    %64 = arith.mulf %61, %63 : vector<2x8x128xf32>
    %65 = vector.shape_cast %64 : vector<2x8x128xf32> to vector<16x128xf32>
    %c2 = arith.constant 2 : index
    %c0_28 = arith.constant 0 : index
    %c0_29 = arith.constant 0 : index
    %66 = vector.load %arg4[%c2, %c0_28, %c0_29] : memref<4x128x384xf32, #tpu.memory_space<vmem>>, vector<1x128x384xf32>
    %67 = vector.shape_cast %66 : vector<1x128x384xf32> to vector<128x384xf32>
    %cst_30 = arith.constant dense<0.000000e+00> : vector<16x384xf32>
    %68 = tpu.matmul %65, %67, %cst_30 {dimension_numbers = #tpu.dot_dimension_numbers<[1], [0], [0], [1], [0, 0, 1, 1], [], []>} : vector<16x128xf32>, vector<128x384xf32>, vector<16x384xf32> -> vector<16x384xf32>
    %c2_31 = arith.constant 2 : index
    %c0_32 = arith.constant 0 : index
    %c0_33 = arith.constant 0 : index
    %69 = vector.load %arg5[%c2_31, %c0_32, %c0_33] : memref<4x1x384xf32, #tpu.memory_space<vmem>>, vector<1x1x384xf32>
    %70 = vector.shape_cast %69 : vector<1x1x384xf32> to vector<1x384xf32>
    %71 = vector.broadcast %70 : vector<1x384xf32> to vector<16x384xf32>
    %72 = arith.addf %68, %71 : vector<16x384xf32>
    %73 = vector.shape_cast %72 : vector<16x384xf32> to vector<2x8x384xf32>
    %74 = vector.extract_strided_slice %73 {offsets = [0, 0, 0], sizes = [2, 8, 128], strides = [1, 1, 1]} : vector<2x8x384xf32> to vector<2x8x128xf32>
    %cst_34 = arith.constant 0.333333343 : f32
    %75 = vector.broadcast %cst_34 : f32 to vector<2x8x128xf32>
    %76 = arith.mulf %74, %75 : vector<2x8x128xf32>
    %77 = vector.extract_strided_slice %73 {offsets = [0, 0, 128], sizes = [2, 8, 128], strides = [1, 1, 1]} : vector<2x8x384xf32> to vector<2x8x128xf32>
    %78 = vector.extract_strided_slice %73 {offsets = [0, 0, 256], sizes = [2, 8, 128], strides = [1, 1, 1]} : vector<2x8x384xf32> to vector<2x8x128xf32>
    "tpu.trace_start"() <{level = 10 : i32, message = "bqe,bke->bqk"}> : () -> ()
    %cst_35 = arith.constant dense<0.000000e+00> : vector<2x8x8xf32>
    %79 = tpu.matmul %76, %77, %cst_35 {dimension_numbers = #tpu.dot_dimension_numbers<[2], [2], [1], [1], [0, 0, 0, 1, 1, 1], [0], [0]>} : vector<2x8x128xf32>, vector<2x8x128xf32>, vector<2x8x8xf32> -> vector<2x8x8xf32>
    "tpu.trace_stop"() : () -> ()
    %cst_36 = arith.constant dense<0xFF800000> : vector<2x8xf32>
    %80 = vector.multi_reduction <maximumf>, %79, %cst_36 [2] : vector<2x8x8xf32> to vector<2x8xf32>
    %81 = vector.shape_cast %80 : vector<2x8xf32> to vector<2x8x1xf32>
    %82 = vector.broadcast %81 : vector<2x8x1xf32> to vector<2x8x8xf32>
    %83 = arith.subf %79, %82 : vector<2x8x8xf32>
    %84 = math.exp %83 : vector<2x8x8xf32>
    %cst_37 = arith.constant dense<0.000000e+00> : vector<2x8xf32>
    %85 = vector.multi_reduction <add>, %84, %cst_37 [2] : vector<2x8x8xf32> to vector<2x8xf32>
    %86 = vector.shape_cast %85 : vector<2x8xf32> to vector<2x8x1xf32>
    "tpu.trace_start"() <{level = 10 : i32, message = "bqk,bke->bqe"}> : () -> ()
    %cst_38 = arith.constant dense<0.000000e+00> : vector<2x8x128xf32>
    %87 = tpu.matmul %84, %78, %cst_38 {dimension_numbers = #tpu.dot_dimension_numbers<[2], [1], [1], [2], [0, 0, 0, 1, 1, 2], [0], [0]>} : vector<2x8x8xf32>, vector<2x8x128xf32>, vector<2x8x128xf32> -> vector<2x8x128xf32>
    "tpu.trace_stop"() : () -> ()
    %88 = tpu.reciprocal %86 : vector<2x8x1xf32> -> vector<2x8x1xf32>
    %89 = vector.broadcast %88 : vector<2x8x1xf32> to vector<2x8x128xf32>
    %90 = arith.mulf %87, %89 : vector<2x8x128xf32>
    %91 = vector.shape_cast %90 : vector<2x8x128xf32> to vector<16x128xf32>
    %c3 = arith.constant 3 : index
    %c0_39 = arith.constant 0 : index
    %c0_40 = arith.constant 0 : index
    %92 = vector.load %arg4[%c3, %c0_39, %c0_40] : memref<4x128x384xf32, #tpu.memory_space<vmem>>, vector<1x128x384xf32>
    %93 = vector.shape_cast %92 : vector<1x128x384xf32> to vector<128x384xf32>
    %cst_41 = arith.constant dense<0.000000e+00> : vector<16x384xf32>
    %94 = tpu.matmul %91, %93, %cst_41 {dimension_numbers = #tpu.dot_dimension_numbers<[1], [0], [0], [1], [0, 0, 1, 1], [], []>} : vector<16x128xf32>, vector<128x384xf32>, vector<16x384xf32> -> vector<16x384xf32>
    %c3_42 = arith.constant 3 : index
    %c0_43 = arith.constant 0 : index
    %c0_44 = arith.constant 0 : index
    %95 = vector.load %arg5[%c3_42, %c0_43, %c0_44] : memref<4x1x384xf32, #tpu.memory_space<vmem>>, vector<1x1x384xf32>
    %96 = vector.shape_cast %95 : vector<1x1x384xf32> to vector<1x384xf32>
    %97 = vector.broadcast %96 : vector<1x384xf32> to vector<16x384xf32>
    %98 = arith.addf %94, %97 : vector<16x384xf32>
    %99 = vector.shape_cast %98 : vector<16x384xf32> to vector<2x8x384xf32>
    %100 = vector.extract_strided_slice %99 {offsets = [0, 0, 0], sizes = [2, 8, 128], strides = [1, 1, 1]} : vector<2x8x384xf32> to vector<2x8x128xf32>
    %cst_45 = arith.constant 0.333333343 : f32
    %101 = vector.broadcast %cst_45 : f32 to vector<2x8x128xf32>
    %102 = arith.mulf %100, %101 : vector<2x8x128xf32>
    %103 = vector.extract_strided_slice %99 {offsets = [0, 0, 128], sizes = [2, 8, 128], strides = [1, 1, 1]} : vector<2x8x384xf32> to vector<2x8x128xf32>
    %104 = vector.extract_strided_slice %99 {offsets = [0, 0, 256], sizes = [2, 8, 128], strides = [1, 1, 1]} : vector<2x8x384xf32> to vector<2x8x128xf32>
    "tpu.trace_start"() <{level = 10 : i32, message = "bqe,bke->bqk"}> : () -> ()
    %cst_46 = arith.constant dense<0.000000e+00> : vector<2x8x8xf32>
    %105 = tpu.matmul %102, %103, %cst_46 {dimension_numbers = #tpu.dot_dimension_numbers<[2], [2], [1], [1], [0, 0, 0, 1, 1, 1], [0], [0]>} : vector<2x8x128xf32>, vector<2x8x128xf32>, vector<2x8x8xf32> -> vector<2x8x8xf32>
    "tpu.trace_stop"() : () -> ()
    %cst_47 = arith.constant dense<0xFF800000> : vector<2x8xf32>
    %106 = vector.multi_reduction <maximumf>, %105, %cst_47 [2] : vector<2x8x8xf32> to vector<2x8xf32>
    %107 = vector.shape_cast %106 : vector<2x8xf32> to vector<2x8x1xf32>
    %108 = vector.broadcast %107 : vector<2x8x1xf32> to vector<2x8x8xf32>
    %109 = arith.subf %105, %108 : vector<2x8x8xf32>
    %110 = math.exp %109 : vector<2x8x8xf32>
    %cst_48 = arith.constant dense<0.000000e+00> : vector<2x8xf32>
    %111 = vector.multi_reduction <add>, %110, %cst_48 [2] : vector<2x8x8xf32> to vector<2x8xf32>
    %112 = vector.shape_cast %111 : vector<2x8xf32> to vector<2x8x1xf32>
    "tpu.trace_start"() <{level = 10 : i32, message = "bqk,bke->bqe"}> : () -> ()
    %cst_49 = arith.constant dense<0.000000e+00> : vector<2x8x128xf32>
    %113 = tpu.matmul %110, %104, %cst_49 {dimension_numbers = #tpu.dot_dimension_numbers<[2], [1], [1], [2], [0, 0, 0, 1, 1, 2], [0], [0]>} : vector<2x8x8xf32>, vector<2x8x128xf32>, vector<2x8x128xf32> -> vector<2x8x128xf32>
    "tpu.trace_stop"() : () -> ()
    %114 = tpu.reciprocal %112 : vector<2x8x1xf32> -> vector<2x8x1xf32>
    %115 = vector.broadcast %114 : vector<2x8x1xf32> to vector<2x8x128xf32>
    %116 = arith.mulf %113, %115 : vector<2x8x128xf32>
    %117 = vector.shape_cast %116 : vector<2x8x128xf32> to vector<16x128xf32>
    %c0_50 = arith.constant 0 : index
    %c0_51 = arith.constant 0 : index
    %118 = vector.load %arg6[%c0_50, %c0_51] : memref<128x128xf32, #tpu.memory_space<vmem>>, vector<128x128xf32>
    %cst_52 = arith.constant dense<0.000000e+00> : vector<16x128xf32>
    %119 = tpu.matmul %117, %118, %cst_52 {dimension_numbers = #tpu.dot_dimension_numbers<[1], [0], [0], [1], [0, 0, 1, 1], [], []>} : vector<16x128xf32>, vector<128x128xf32>, vector<16x128xf32> -> vector<16x128xf32>
    %c0_53 = arith.constant 0 : index
    %c0_54 = arith.constant 0 : index
    %120 = vector.load %arg7[%c0_53, %c0_54] : memref<1x128xf32, #tpu.memory_space<vmem>>, vector<1x128xf32>
    %121 = vector.broadcast %120 : vector<1x128xf32> to vector<16x128xf32>
    %122 = arith.addf %119, %121 : vector<16x128xf32>
    %cst_55 = arith.constant dense<0xFF800000> : vector<16xf32>
    %123 = vector.multi_reduction <maximumf>, %122, %cst_55 [1] : vector<16x128xf32> to vector<16xf32>
    %124 = vector.shape_cast %123 : vector<16xf32> to vector<16x1xf32>
    %125 = vector.broadcast %124 : vector<16x1xf32> to vector<16x128xf32>
    %126 = arith.subf %122, %125 : vector<16x128xf32>
    %127 = math.exp %126 : vector<16x128xf32>
    %cst_56 = arith.constant dense<0.000000e+00> : vector<16xf32>
    %128 = vector.multi_reduction <add>, %127, %cst_56 [1] : vector<16x128xf32> to vector<16xf32>
    %129 = vector.shape_cast %128 : vector<16xf32> to vector<16x1xf32>
    %130 = math.log %129 : vector<16x1xf32>
    %131 = vector.broadcast %130 : vector<16x1xf32> to vector<16x128xf32>
    %132 = arith.subf %126, %131 : vector<16x128xf32>
    %133 = vector.shape_cast %132 : vector<16x128xf32> to vector<2x8x128xf32>
    %c0_57 = arith.constant 0 : index
    %c0_58 = arith.constant 0 : index
    %c0_59 = arith.constant 0 : index
    %134 = vector.load %arg8[%c0_57, %c0_58, %c0_59] : memref<2x8x128xf32, #tpu.memory_space<vmem>>, vector<2x8x128xf32>
    tpu.vector_store %arg8[%c0_57, %c0_58, %c0_59], %133 {strides = array<i32>} : memref<2x8x128xf32, #tpu.memory_space<vmem>>, vector<2x8x128xf32>,
    return
  }
  func.func @transform_0(%arg0: i32) -> (i32, i32) {
    %c0_i32 = arith.constant 0 : i32
    %c0_i32_0 = arith.constant 0 : i32
    return %arg0, %c0_i32 : i32, i32
  }
  func.func @transform_1(%arg0: i32) -> (i32, i32) {
    %c0_i32 = arith.constant 0 : i32
    %c0_i32_0 = arith.constant 0 : i32
    %c0_i32_1 = arith.constant 0 : i32
    return %c0_i32, %c0_i32_0 : i32, i32
  }
  func.func @transform_2(%arg0: i32) -> (i32, i32) {
    %c0_i32 = arith.constant 0 : i32
    %c0_i32_0 = arith.constant 0 : i32
    %c0_i32_1 = arith.constant 0 : i32
    return %c0_i32, %c0_i32_0 : i32, i32
  }
  func.func @transform_3(%arg0: i32) -> (i32, i32, i32) {
    %c0_i32 = arith.constant 0 : i32
    %c0_i32_0 = arith.constant 0 : i32
    %c0_i32_1 = arith.constant 0 : i32
    %c0_i32_2 = arith.constant 0 : i32
    return %c0_i32, %c0_i32_0, %c0_i32_1 : i32, i32, i32
  }
  func.func @transform_4(%arg0: i32) -> (i32, i32, i32) {
    %c0_i32 = arith.constant 0 : i32
    %c0_i32_0 = arith.constant 0 : i32
    %c0_i32_1 = arith.constant 0 : i32
    %c0_i32_2 = arith.constant 0 : i32
    return %c0_i32, %c0_i32_0, %c0_i32_1 : i32, i32, i32
  }
  func.func @transform_5(%arg0: i32) -> (i32, i32) {
    %c0_i32 = arith.constant 0 : i32
    %c0_i32_0 = arith.constant 0 : i32
    %c0_i32_1 = arith.constant 0 : i32
    return %c0_i32, %c0_i32_0 : i32, i32
  }
  func.func @transform_6(%arg0: i32) -> (i32, i32) {
    %c0_i32 = arith.constant 0 : i32
    %c0_i32_0 = arith.constant 0 : i32
    %c0_i32_1 = arith.constant 0 : i32
    return %c0_i32, %c0_i32_0 : i32, i32
  }
  func.func @transform_7(%arg0: i32) -> (i32, i32, i32) {
    %c0_i32 = arith.constant 0 : i32
    %c0_i32_0 = arith.constant 0 : i32
    %c0_i32_1 = arith.constant 0 : i32
    return %arg0, %c0_i32, %c0_i32_0 : i32, i32, i32
  }
}

</mosaic_0001>

<llo_original>
// kernel: tpu_custom_call.1
$region0: #{tpu_custom_call.1}
  #allocation0 [shape = 'u32[]', space=smem, size = 0x4, offset = 0x4, fixed_abs, tag = 'smem constant byte address 0x4 - core index']
  #allocation1 [shape = 'u32[144,128]{1,0:T(1,128)}', space=vmem, size = 0x12000, scoped, tag = 'internal scratch']
  %s0 = inlined_call_operand.hbm [shape: s32[2,8], index: 0, kind: input, shape index: {}]
  %s1 = inlined_call_operand.hbm [shape: f32[8,128], index: 1, kind: input, shape index: {}]
  %s2 = inlined_call_operand.hbm [shape: f32[8,128], index: 2, kind: input, shape index: {}]
  %s3 = inlined_call_operand.hbm [shape: f32[4,128,384], index: 3, kind: input, shape index: {}]
  %s4 = inlined_call_operand.hbm [shape: f32[4,1,384], index: 4, kind: input, shape index: {}]
  %s5 = inlined_call_operand.hbm [shape: f32[128,128], index: 5, kind: input, shape index: {}]
  %s6 = inlined_call_operand.vmem [shape: f32[1,128], index: 6, kind: input, shape index: {}]
  %s7 = inlined_call_operand.hbm [shape: f32[2,8,128], index: 7, kind: output, shape index: {}]
  %s8 = sld [smem:[#allocation0]]
  $region62: #{tpu_custom_call.1} parent=0
    _
  %s10 = ssub.s32 1, %s8
  %s11 = scalar_select 0, %s10, %s8
  $region1: #{tpu_custom_call.1} parent=0
    #allocation2 [shape = 'u8[1024]{0}', space=vmem, size = 0x400, scoped, tag = 'input window, operand 0, single buffered']
    #allocation3 [shape = 's32[1]{0}', space=sflag, size = 0x4, scoped, tag = 'scoped memory for tpu_custom_call.1']
    #allocation4 [shape = 's32[1]{0}', space=sflag, size = 0x4, scoped, tag = 'scoped memory for tpu_custom_call.1']
    #allocation5 [shape = 'u8[4096]{0}', space=vmem, size = 0x1000, scoped, tag = 'input window, operand 1, single buffered']
    #allocation6 [shape = 's32[1]{0}', space=sflag, size = 0x4, scoped, tag = 'scoped memory for tpu_custom_call.1']
    #allocation7 [shape = 'u8[4096]{0}', space=vmem, size = 0x1000, scoped, tag = 'input window, operand 2, single buffered']
    #allocation8 [shape = 'u8[786432]{0}', space=vmem, size = 0xc0000, scoped, tag = 'input window, operand 3, single buffered']
    #allocation9 [shape = 's32[1]{0}', space=sflag, size = 0x4, scoped, tag = 'scoped memory for tpu_custom_call.1']
    #allocation10 [shape = 'u8[6144]{0}', space=vmem, size = 0x1800, scoped, tag = 'input window, operand 4, single buffered']
    #allocation11 [shape = 'u8[65536]{0}', space=vmem, size = 0x10000, scoped, tag = 'input window, operand 5, single buffered']
    #allocation12 [shape = 's32[1]{0}', space=sflag, size = 0x4, scoped, tag = 'scoped memory for tpu_custom_call.1']
    #allocation13 [shape = 'u8[8192]{0}', space=vmem, size = 0x2000, scoped, tag = 'output window, operand 0, single buffered']
    %12 = vsyncpa [#allocation3], 0
    %13 = vsyncpa [#allocation6], 0
    %14 = vsyncpa [#allocation9], 0
    %15 = vsyncpa [#allocation12], 0
    %16 = vsyncpa [#allocation4], 0
    // Predicated region
    $region2: #{tpu_custom_call.1} parent=1 // pred_check
      _
    $region3: #{tpu_custom_call.1} parent=1 // pred_check_branch
      %18 = sbr.rel (0) target = $region5
    $region4: #{tpu_custom_call.1} parent=1 // pred_region
      %s20 = ssub.s32 32, 32
      %21 = vsyncadd [#allocation3], %s20
      %s23 = sshll.u32 [#allocation2], 4
      %s24 = int_to_ptr.vmem [resolvable:$true] %s23
      %26 = dma.hbm_to_vmem [thread:$0]  %s0, 32, %s24, [#allocation3]
    $region5: #{tpu_custom_call.1} parent=1 // pred_fallthru
      _
    // Predicated region
    $region6: #{tpu_custom_call.1} parent=1 // pred_check
      _
    $region7: #{tpu_custom_call.1} parent=1 // pred_check_branch
      %28 = sbr.rel (0) target = $region9
    $region8: #{tpu_custom_call.1} parent=1 // pred_region
      %s30 = ssub.s32 128, 128
      %31 = vsyncadd [#allocation6], %s30
      %s33 = sshll.u32 [#allocation5], 4
      %s34 = int_to_ptr.vmem [resolvable:$true] %s33
      %36 = dma.hbm_to_vmem [thread:$0]  %s1, 128, %s34, [#allocation6]
    $region9: #{tpu_custom_call.1} parent=1 // pred_fallthru
      _
    // Predicated region
    $region10: #{tpu_custom_call.1} parent=1 // pred_check
      _
    $region11: #{tpu_custom_call.1} parent=1 // pred_check_branch
      %38 = sbr.rel (0) target = $region13
    $region12: #{tpu_custom_call.1} parent=1 // pred_region
      %s40 = ssub.s32 128, 128
      %41 = vsyncadd [#allocation6], %s40
      %s43 = sshll.u32 [#allocation7], 4
      %s44 = int_to_ptr.vmem [resolvable:$true] %s43
      %46 = dma.hbm_to_vmem [thread:$0]  %s2, 128, %s44, [#allocation6]
    $region13: #{tpu_custom_call.1} parent=1 // pred_fallthru
      _
    // Predicated region
    $region14: #{tpu_custom_call.1} parent=1 // pred_check
      _
    $region15: #{tpu_custom_call.1} parent=1 // pred_check_branch
      %48 = sbr.rel (0) target = $region17
    $region16: #{tpu_custom_call.1} parent=1 // pred_region
      %s50 = ssub.s32 24576, 24576
      %51 = vsyncadd [#allocation9], %s50
      %s52 = sshll.u32 [#allocation8], 4
      %s53 = int_to_ptr.vmem [resolvable:$true] %s52
      %58 = dma.hbm_to_vmem [thread:$0]  %s3, 24576, %s53, [#allocation9], 384, 384, 24
    $region17: #{tpu_custom_call.1} parent=1 // pred_fallthru
      _
    // Predicated region
    $region18: #{tpu_custom_call.1} parent=1 // pred_check
      _
    $region19: #{tpu_custom_call.1} parent=1 // pred_check_branch
      %60 = sbr.rel (0) target = $region21
    $region20: #{tpu_custom_call.1} parent=1 // pred_region
      %s62 = ssub.s32 192, 192
      %63 = vsyncadd [#allocation9], %s62
      %s64 = sshll.u32 [#allocation10], 4
      %s65 = int_to_ptr.vmem [resolvable:$true] %s64
      %70 = dma.hbm_to_vmem [thread:$0]  %s4, 192, %s65, [#allocation9], 48, 48, 3
    $region21: #{tpu_custom_call.1} parent=1 // pred_fallthru
      _
    // Predicated region
    $region22: #{tpu_custom_call.1} parent=1 // pred_check
      _
    $region23: #{tpu_custom_call.1} parent=1 // pred_check_branch
      %72 = sbr.rel (0) target = $region25
    $region24: #{tpu_custom_call.1} parent=1 // pred_region
      %s74 = ssub.s32 2048, 2048
      %75 = vsyncadd [#allocation12], %s74
      %s76 = sshll.u32 [#allocation11], 4
      %s77 = int_to_ptr.vmem [resolvable:$true] %s76
      %82 = dma.hbm_to_vmem [thread:$0]  %s5, 2048, %s77, [#allocation12], 128, 128, 8
    $region25: #{tpu_custom_call.1} parent=1 // pred_fallthru
      _
    // Predicated region
    $region26: #{tpu_custom_call.1} parent=1 // pred_check
      _
    $region27: #{tpu_custom_call.1} parent=1 // pred_check_branch
      %84 = sbr.rel (0) target = $region29
    $region28: #{tpu_custom_call.1} parent=1 // pred_region
      _
    $region29: #{tpu_custom_call.1} parent=1 // pred_fallthru
      _
    // Predicated region
    $region30: #{tpu_custom_call.1} parent=1 // pred_check
      _
    $region31: #{tpu_custom_call.1} parent=1 // pred_check_branch
      %86 = sbr.rel (0) target = $region33
    $region32: #{tpu_custom_call.1} parent=1 // pred_region
      %87 = dma.done [#allocation3], 32
    $region33: #{tpu_custom_call.1} parent=1 // pred_fallthru
      _
    // Predicated region
    $region34: #{tpu_custom_call.1} parent=1 // pred_check
      _
    $region35: #{tpu_custom_call.1} parent=1 // pred_check_branch
      %89 = sbr.rel (0) target = $region37
    $region36: #{tpu_custom_call.1} parent=1 // pred_region
      %90 = dma.done [#allocation6], 128
    $region37: #{tpu_custom_call.1} parent=1 // pred_fallthru
      _
    // Predicated region
    $region38: #{tpu_custom_call.1} parent=1 // pred_check
      _
    $region39: #{tpu_custom_call.1} parent=1 // pred_check_branch
      %92 = sbr.rel (0) target = $region41
    $region40: #{tpu_custom_call.1} parent=1 // pred_region
      %93 = dma.done [#allocation6], 128
    $region41: #{tpu_custom_call.1} parent=1 // pred_fallthru
      _
    // Predicated region
    $region42: #{tpu_custom_call.1} parent=1 // pred_check
      _
    $region43: #{tpu_custom_call.1} parent=1 // pred_check_branch
      %95 = sbr.rel (0) target = $region45
    $region44: #{tpu_custom_call.1} parent=1 // pred_region
      %96 = dma.done [#allocation9], 24576
    $region45: #{tpu_custom_call.1} parent=1 // pred_fallthru
      _
    // Predicated region
    $region46: #{tpu_custom_call.1} parent=1 // pred_check
      _
    $region47: #{tpu_custom_call.1} parent=1 // pred_check_branch
      %98 = sbr.rel (0) target = $region49
    $region48: #{tpu_custom_call.1} parent=1 // pred_region
      %99 = dma.done [#allocation9], 192
    $region49: #{tpu_custom_call.1} parent=1 // pred_fallthru
      _
    // Predicated region
    $region50: #{tpu_custom_call.1} parent=1 // pred_check
      _
    $region51: #{tpu_custom_call.1} parent=1 // pred_check_branch
      %101 = sbr.rel (0) target = $region53
    $region52: #{tpu_custom_call.1} parent=1 // pred_region
      %102 = dma.done [#allocation12], 2048
    $region53: #{tpu_custom_call.1} parent=1 // pred_fallthru
      _
    %v103 = vld [vmem:[#allocation2] sm:$0x3]
    %v104 = vlaneseq
    %v105 = vand.u32 %v104, 127
    %v106 = vlaneseq
    %v107 = vshrl.u32 %v106, 7
    %v108 = vsub.s32 0, %v107
    %v109 = vrot.slane %v103, %v108
    %111 = vbcast.lane.b32.xlu0 %v109, 256
    %v112 = vpop.permute.xlu0 %111
    %v113 = vlaneseq
    %v114 = vshrl.u32 %v113, 7
    %v115 = vsub.s32 1, %v114
    %v116 = vrot.slane %v103, %v115
    %118 = vbcast.lane.b32.xlu0 %v116, 256
    %v119 = vpop.permute.xlu0 %118
    %vm120 = vcmp.eq.s32.totalorder %v105, %v112
    %vm121 = vcmp.eq.s32.totalorder %v105, %v119
    %v122 = vsel %vm120, 1, 0
    %v123 = vsel %vm121, 1, 0
    %v124 = vcvt.s32.f32 %v122
    %v125 = vcvt.s32.f32 %v123
    %v126 = vld [vmem:[#allocation7] sm:$0xff]
    %v127 = vld [vmem:[#allocation5] sm:$0xff]
    %vm128 = vcmask 64512
    %v130 = vsel %vm128, %v124, 0
    %v133 = vsel %vm128, %v125, 0
    %135 = vmatprep.subr.mxu0 0.0
    %136 = vmatpush1.msra.mxu0 0.0
    %137 = vmatprep.subr.mxu0 0.0
    %138 = vmatpush1.msra.mxu0 0.0
    %139 = vmatprep.subr.mxu0 0.0
    %140 = vmatpush1.msra.mxu0 0.0
    %141 = vmatprep.subr.mxu0 0.0
    %142 = vmatpush1.msra.mxu0 0.0
    %143 = vmatprep.subr.mxu0 0.0
    %144 = vmatpush1.msra.mxu0 0.0
    %145 = vmatprep.subr.mxu0 0.0
    %146 = vmatpush1.msra.mxu0 0.0
    %147 = vmatprep.subr.mxu0 0.0
    %148 = vmatpush1.msra.mxu0 0.0
    %149 = vmatprep.subr.mxu0 0.0
    %150 = vmatpush1.msra.mxu0 0.0
    %151 = vmatprep.subr.mxu0 0.0
    %152 = vmatpush1.msra.mxu0 0.0
    %153 = vmatprep.subr.mxu0 0.0
    %154 = vmatpush1.msra.mxu0 0.0
    %155 = vmatprep.subr.mxu0 0.0
    %156 = vmatpush1.msra.mxu0 0.0
    %157 = vmatprep.subr.mxu0 0.0
    %158 = vmatpush1.msra.mxu0 0.0
    %159 = vmatprep.subr.mxu0 0.0
    %160 = vmatpush1.msra.mxu0 0.0
    %161 = vmatprep.subr.mxu0 0.0
    %162 = vmatpush1.msra.mxu0 0.0
    %163 = vmatprep.subr.mxu0 0.0
    %164 = vmatpush1.msra.mxu0 0.0
    %165 = vmatprep.subr.mxu0 0.0
    %166 = vmatpush1.msra.mxu0 %v126
    %167 = vmatprep.subr.mxu0 0.0
    %168 = vmatpush2.msra.mxu0 0.0
    %169 = vmatprep.subr.mxu0 0.0
    %170 = vmatpush2.msra.mxu0 0.0
    %171 = vmatprep.subr.mxu0 0.0
    %172 = vmatpush2.msra.mxu0 0.0
    %173 = vmatprep.subr.mxu0 0.0
    %174 = vmatpush2.msra.mxu0 0.0
    %175 = vmatprep.subr.mxu0 0.0
    %176 = vmatpush2.msra.mxu0 0.0
    %177 = vmatprep.subr.mxu0 0.0
    %178 = vmatpush2.msra.mxu0 0.0
    %179 = vmatprep.subr.mxu0 0.0
    %180 = vmatpush2.msra.mxu0 0.0
    %181 = vmatprep.subr.mxu0 0.0
    %182 = vmatpush2.msra.mxu0 0.0
    %183 = vmatprep.subr.mxu0 0.0
    %184 = vmatpush2.msra.mxu0 0.0
    %185 = vmatprep.subr.mxu0 0.0
    %186 = vmatpush2.msra.mxu0 0.0
    %187 = vmatprep.subr.mxu0 0.0
    %188 = vmatpush2.msra.mxu0 0.0
    %189 = vmatprep.subr.mxu0 0.0
    %190 = vmatpush2.msra.mxu0 0.0
    %191 = vmatprep.subr.mxu0 0.0
    %192 = vmatpush2.msra.mxu0 0.0
    %193 = vmatprep.subr.mxu0 0.0
    %194 = vmatpush2.msra.mxu0 0.0
    %195 = vmatprep.subr.mxu0 0.0
    %196 = vmatpush2.msra.mxu0 0.0
    %197 = vmatprep.subr.mxu0 0.0
    %198 = vmatpush2.msra.mxu0 0.0
    %199 = vmatprep.mubr.f32.mxu0 0.0
    %200 = vmatmul.mubr.f32.gmra.mxu0 %v130
    %v201 = vpop.f32.mrf.mxu0
    %v202 = vadd.f32 %v127, %v201
    %v203 = vpop.f32.mrf.mxu0
    %204 = vmatprep.mubr.f32.mxu0 0.0
    %205 = vmatmul.mubr.f32.gmra.mxu0 %v133
    %v206 = vpop.f32.mrf.mxu0
    %v207 = vadd.f32 %v127, %v206
    %v208 = vpop.f32.mrf.mxu0
    %209 = vdwg.mxu0
    %v210 = vld [vmem:[#allocation8] sm:$0xff]
    %v211 = vld [vmem:[#allocation8 + $0x8] sm:$0xff]
    %v212 = vld [vmem:[#allocation8 + $0x10] sm:$0xff]
    %v213 = vld [vmem:[#allocation8 + $0x18] sm:$0xff]
    %v214 = vld [vmem:[#allocation8 + $0x20] sm:$0xff]
    %v215 = vld [vmem:[#allocation8 + $0x28] sm:$0xff]
    %v216 = vld [vmem:[#allocation8 + $0x30] sm:$0xff]
    %v217 = vld [vmem:[#allocation8 + $0x38] sm:$0xff]
    %v218 = vld [vmem:[#allocation8 + $0x40] sm:$0xff]
    %v219 = vld [vmem:[#allocation8 + $0x48] sm:$0xff]
    %v220 = vld [vmem:[#allocation8 + $0x50] sm:$0xff]
    %v221 = vld [vmem:[#allocation8 + $0x58] sm:$0xff]
    %v222 = vld [vmem:[#allocation8 + $0x60] sm:$0xff]
    %v223 = vld [vmem:[#allocation8 + $0x68] sm:$0xff]
    %v224 = vld [vmem:[#allocation8 + $0x70] sm:$0xff]
    %v225 = vld [vmem:[#allocation8 + $0x78] sm:$0xff]
    %v226 = vld [vmem:[#allocation8 + $0x80] sm:$0xff]
    %v227 = vld [vmem:[#allocation8 + $0x88] sm:$0xff]
    %v228 = vld [vmem:[#allocation8 + $0x90] sm:$0xff]
    %v229 = vld [vmem:[#allocation8 + $0x98] sm:$0xff]
    %v230 = vld [vmem:[#allocation8 + $0xa0] sm:$0xff]
    %v231 = vld [vmem:[#allocation8 + $0xa8] sm:$0xff]
    %v232 = vld [vmem:[#allocation8 + $0xb0] sm:$0xff]
    %v233 = vld [vmem:[#allocation8 + $0xb8] sm:$0xff]
    %v234 = vld [vmem:[#allocation8 + $0xc0] sm:$0xff]
    %v235 = vld [vmem:[#allocation8 + $0xc8] sm:$0xff]
    %v236 = vld [vmem:[#allocation8 + $0xd0] sm:$0xff]
    %v237 = vld [vmem:[#allocation8 + $0xd8] sm:$0xff]
    %v238 = vld [vmem:[#allocation8 + $0xe0] sm:$0xff]
    %v239 = vld [vmem:[#allocation8 + $0xe8] sm:$0xff]
    %v240 = vld [vmem:[#allocation8 + $0xf0] sm:$0xff]
    %v241 = vld [vmem:[#allocation8 + $0xf8] sm:$0xff]
    %v242 = vld [vmem:[#allocation8 + $0x100] sm:$0xff]
    %v243 = vld [vmem:[#allocation8 + $0x108] sm:$0xff]
    %v244 = vld [vmem:[#allocation8 + $0x110] sm:$0xff]
    %v245 = vld [vmem:[#allocation8 + $0x118] sm:$0xff]
    %v246 = vld [vmem:[#allocation8 + $0x120] sm:$0xff]
    %v247 = vld [vmem:[#allocation8 + $0x128] sm:$0xff]
    %v248 = vld [vmem:[#allocation8 + $0x130] sm:$0xff]
    %v249 = vld [vmem:[#allocation8 + $0x138] sm:$0xff]
    %v250 = vld [vmem:[#allocation8 + $0x140] sm:$0xff]
    %v251 = vld [vmem:[#allocation8 + $0x148] sm:$0xff]
    %v252 = vld [vmem:[#allocation8 + $0x150] sm:$0xff]
    %v253 = vld [vmem:[#allocation8 + $0x158] sm:$0xff]
    %v254 = vld [vmem:[#allocation8 + $0x160] sm:$0xff]
    %v255 = vld [vmem:[#allocation8 + $0x168] sm:$0xff]
    %v256 = vld [vmem:[#allocation8 + $0x170] sm:$0xff]
    %v257 = vld [vmem:[#allocation8 + $0x178] sm:$0xff]
    %v258 = vld [vmem:[#allocation10] sm:$0x7]
    %v260 = vlaneseq
    %v261 = vshrl.u32 %v260, 7
    %v262 = vsub.s32 0, %v261
    %v263 = vrot.slane %v258, %v262
    %v264 = vlaneseq
    %v265 = vshrl.u32 %v264, 7
    %v266 = vsub.s32 1, %v265
    %v267 = vrot.slane %v258, %v266
    %v268 = vlaneseq
    %v269 = vshrl.u32 %v268, 7
    %v270 = vsub.s32 2, %v269
    %v271 = vrot.slane %v258, %v270
    %275 = vmatprep.subr.mxu0 %v256
    %276 = vmatpush1.msra.mxu0 %v255
    %277 = vmatprep.subr.mxu0 %v253
    %278 = vmatpush1.msra.mxu0 %v252
    %279 = vmatprep.subr.mxu0 %v250
    %280 = vmatpush1.msra.mxu0 %v249
    %281 = vmatprep.subr.mxu0 %v247
    %282 = vmatpush1.msra.mxu0 %v246
    %283 = vmatprep.subr.mxu0 %v244
    %284 = vmatpush1.msra.mxu0 %v243
    %285 = vmatprep.subr.mxu0 %v241
    %286 = vmatpush1.msra.mxu0 %v240
    %287 = vmatprep.subr.mxu0 %v238
    %288 = vmatpush1.msra.mxu0 %v237
    %289 = vmatprep.subr.mxu0 %v235
    %290 = vmatpush1.msra.mxu0 %v234
    %291 = vmatprep.subr.mxu0 %v232
    %292 = vmatpush1.msra.mxu0 %v231
    %293 = vmatprep.subr.mxu0 %v229
    %294 = vmatpush1.msra.mxu0 %v228
    %295 = vmatprep.subr.mxu0 %v226
    %296 = vmatpush1.msra.mxu0 %v225
    %297 = vmatprep.subr.mxu0 %v223
    %298 = vmatpush1.msra.mxu0 %v222
    %299 = vmatprep.subr.mxu0 %v220
    %300 = vmatpush1.msra.mxu0 %v219
    %301 = vmatprep.subr.mxu0 %v217
    %302 = vmatpush1.msra.mxu0 %v216
    %303 = vmatprep.subr.mxu0 %v214
    %304 = vmatpush1.msra.mxu0 %v213
    %305 = vmatprep.subr.mxu0 %v211
    %306 = vmatpush1.msra.mxu0 %v210
    %307 = vmatprep.subr.mxu0 0.0
    %308 = vmatpush2.msra.mxu0 0.0
    %309 = vmatprep.subr.mxu0 0.0
    %310 = vmatpush2.msra.mxu0 0.0
    %311 = vmatprep.subr.mxu0 0.0
    %312 = vmatpush2.msra.mxu0 0.0
    %313 = vmatprep.subr.mxu0 0.0
    %314 = vmatpush2.msra.mxu0 0.0
    %315 = vmatprep.subr.mxu0 0.0
    %316 = vmatpush2.msra.mxu0 0.0
    %317 = vmatprep.subr.mxu0 0.0
    %318 = vmatpush2.msra.mxu0 0.0
    %319 = vmatprep.subr.mxu0 0.0
    %320 = vmatpush2.msra.mxu0 0.0
    %321 = vmatprep.subr.mxu0 0.0
    %322 = vmatpush2.msra.mxu0 0.0
    %323 = vmatprep.subr.mxu0 0.0
    %324 = vmatpush2.msra.mxu0 0.0
    %325 = vmatprep.subr.mxu0 0.0
    %326 = vmatpush2.msra.mxu0 0.0
    %327 = vmatprep.subr.mxu0 0.0
    %328 = vmatpush2.msra.mxu0 0.0
    %329 = vmatprep.subr.mxu0 0.0
    %330 = vmatpush2.msra.mxu0 0.0
    %331 = vmatprep.subr.mxu0 0.0
    %332 = vmatpush2.msra.mxu0 0.0
    %333 = vmatprep.subr.mxu0 0.0
    %334 = vmatpush2.msra.mxu0 0.0
    %335 = vmatprep.subr.mxu0 0.0
    %336 = vmatpush2.msra.mxu0 0.0
    %337 = vmatprep.subr.mxu0 0.0
    %338 = vmatpush2.msra.mxu0 0.0
    %339 = vmatprep.mubr.f32.mxu0 0.0
    %340 = vmatmul.mubr.f32.gmra.mxu0 %v202
    %v341 = vpop.f32.mrf.mxu0
    %v342 = vadd.f32 %v263, %v341
    %v343 = vpop.f32.mrf.mxu0
    %v344 = vadd.f32 %v267, %v343
    %345 = vmatprep.mubr.f32.mxu0 0.0
    %346 = vmatmul.mubr.f32.gmra.mxu0 %v207
    %v347 = vpop.f32.mrf.mxu0
    %v348 = vadd.f32 %v263, %v347
    %v349 = vpop.f32.mrf.mxu0
    %v350 = vadd.f32 %v267, %v349
    %351 = vdwg.mxu0
    %352 = vmatprep.subr.mxu0 0.0
    %353 = vmatpush1.msra.mxu0 %v257
    %354 = vmatprep.subr.mxu0 0.0
    %355 = vmatpush1.msra.mxu0 %v254
    %356 = vmatprep.subr.mxu0 0.0
    %357 = vmatpush1.msra.mxu0 %v251
    %358 = vmatprep.subr.mxu0 0.0
    %359 = vmatpush1.msra.mxu0 %v248
    %360 = vmatprep.subr.mxu0 0.0
    %361 = vmatpush1.msra.mxu0 %v245
    %362 = vmatprep.subr.mxu0 0.0
    %363 = vmatpush1.msra.mxu0 %v242
    %364 = vmatprep.subr.mxu0 0.0
    %365 = vmatpush1.msra.mxu0 %v239
    %366 = vmatprep.subr.mxu0 0.0
    %367 = vmatpush1.msra.mxu0 %v236
    %368 = vmatprep.subr.mxu0 0.0
    %369 = vmatpush1.msra.mxu0 %v233
    %370 = vmatprep.subr.mxu0 0.0
    %371 = vmatpush1.msra.mxu0 %v230
    %372 = vmatprep.subr.mxu0 0.0
    %373 = vmatpush1.msra.mxu0 %v227
    %374 = vmatprep.subr.mxu0 0.0
    %375 = vmatpush1.msra.mxu0 %v224
    %376 = vmatprep.subr.mxu0 0.0
    %377 = vmatpush1.msra.mxu0 %v221
    %378 = vmatprep.subr.mxu0 0.0
    %379 = vmatpush1.msra.mxu0 %v218
    %380 = vmatprep.subr.mxu0 0.0
    %381 = vmatpush1.msra.mxu0 %v215
    %382 = vmatprep.subr.mxu0 0.0
    %383 = vmatpush1.msra.mxu0 %v212
    %384 = vmatprep.subr.mxu0 0.0
    %385 = vmatpush2.msra.mxu0 0.0
    %386 = vmatprep.subr.mxu0 0.0
    %387 = vmatpush2.msra.mxu0 0.0
    %388 = vmatprep.subr.mxu0 0.0
    %389 = vmatpush2.msra.mxu0 0.0
    %390 = vmatprep.subr.mxu0 0.0
    %391 = vmatpush2.msra.mxu0 0.0
    %392 = vmatprep.subr.mxu0 0.0
    %393 = vmatpush2.msra.mxu0 0.0
    %394 = vmatprep.subr.mxu0 0.0
    %395 = vmatpush2.msra.mxu0 0.0
    %396 = vmatprep.subr.mxu0 0.0
    %397 = vmatpush2.msra.mxu0 0.0
    %398 = vmatprep.subr.mxu0 0.0
    %399 = vmatpush2.msra.mxu0 0.0
    %400 = vmatprep.subr.mxu0 0.0
    %401 = vmatpush2.msra.mxu0 0.0
    %402 = vmatprep.subr.mxu0 0.0
    %403 = vmatpush2.msra.mxu0 0.0
    %404 = vmatprep.subr.mxu0 0.0
    %405 = vmatpush2.msra.mxu0 0.0
    %406 = vmatprep.subr.mxu0 0.0
    %407 = vmatpush2.msra.mxu0 0.0
    %408 = vmatprep.subr.mxu0 0.0
    %409 = vmatpush2.msra.mxu0 0.0
    %410 = vmatprep.subr.mxu0 0.0
    %411 = vmatpush2.msra.mxu0 0.0
    %412 = vmatprep.subr.mxu0 0.0
    %413 = vmatpush2.msra.mxu0 0.0
    %414 = vmatprep.subr.mxu0 0.0
    %415 = vmatpush2.msra.mxu0 0.0
    %416 = vmatprep.mubr.f32.mxu0 0.0
    %417 = vmatmul.mubr.f32.gmra.mxu0 %v202
    %v418 = vpop.f32.mrf.mxu0
    %v419 = vadd.f32 %v271, %v418
    %v420 = vpop.f32.mrf.mxu0
    %421 = vmatprep.mubr.f32.mxu0 0.0
    %422 = vmatmul.mubr.f32.gmra.mxu0 %v207
    %v423 = vpop.f32.mrf.mxu0
    %v424 = vadd.f32 %v271, %v423
    %v425 = vpop.f32.mrf.mxu0
    %426 = vdwg.mxu0
    %v427 = vmul.f32 %v342, 0.33333334
    %v428 = vmul.f32 %v348, 0.33333334
    %429 = vmatprep.subr.mxu0 0.0
    %430 = vmatpush1.xpose.msra.mxu0 0.0
    %431 = vmatprep.subr.mxu0 0.0
    %432 = vmatpush1.xpose.msra.mxu0 0.0
    %433 = vmatprep.subr.mxu0 0.0
    %434 = vmatpush1.xpose.msra.mxu0 0.0
    %435 = vmatprep.subr.mxu0 0.0
    %436 = vmatpush1.xpose.msra.mxu0 0.0
    %437 = vmatprep.subr.mxu0 0.0
    %438 = vmatpush1.xpose.msra.mxu0 0.0
    %439 = vmatprep.subr.mxu0 0.0
    %440 = vmatpush1.xpose.msra.mxu0 0.0
    %441 = vmatprep.subr.mxu0 0.0
    %442 = vmatpush1.xpose.msra.mxu0 0.0
    %443 = vmatprep.subr.mxu0 0.0
    %444 = vmatpush1.xpose.msra.mxu0 0.0
    %445 = vmatprep.subr.mxu0 0.0
    %446 = vmatpush1.xpose.msra.mxu0 0.0
    %447 = vmatprep.subr.mxu0 0.0
    %448 = vmatpush1.xpose.msra.mxu0 0.0
    %449 = vmatprep.subr.mxu0 0.0
    %450 = vmatpush1.xpose.msra.mxu0 0.0
    %451 = vmatprep.subr.mxu0 0.0
    %452 = vmatpush1.xpose.msra.mxu0 0.0
    %453 = vmatprep.subr.mxu0 0.0
    %454 = vmatpush1.xpose.msra.mxu0 0.0
    %455 = vmatprep.subr.mxu0 0.0
    %456 = vmatpush1.xpose.msra.mxu0 0.0
    %457 = vmatprep.subr.mxu0 0.0
    %458 = vmatpush1.xpose.msra.mxu0 0.0
    %459 = vmatprep.subr.mxu0 0.0
    %460 = vmatpush1.xpose.msra.mxu0 %v344
    %461 = vmatprep.subr.mxu0 0.0
    %462 = vmatpush2.xpose.msra.mxu0 0.0
    %463 = vmatprep.subr.mxu0 0.0
    %464 = vmatpush2.xpose.msra.mxu0 0.0
    %465 = vmatprep.subr.mxu0 0.0
    %466 = vmatpush2.xpose.msra.mxu0 0.0
    %467 = vmatprep.subr.mxu0 0.0
    %468 = vmatpush2.xpose.msra.mxu0 0.0
    %469 = vmatprep.subr.mxu0 0.0
    %470 = vmatpush2.xpose.msra.mxu0 0.0
    %471 = vmatprep.subr.mxu0 0.0
    %472 = vmatpush2.xpose.msra.mxu0 0.0
    %473 = vmatprep.subr.mxu0 0.0
    %474 = vmatpush2.xpose.msra.mxu0 0.0
    %475 = vmatprep.subr.mxu0 0.0
    %476 = vmatpush2.xpose.msra.mxu0 0.0
    %477 = vmatprep.subr.mxu0 0.0
    %478 = vmatpush2.xpose.msra.mxu0 0.0
    %479 = vmatprep.subr.mxu0 0.0
    %480 = vmatpush2.xpose.msra.mxu0 0.0
    %481 = vmatprep.subr.mxu0 0.0
    %482 = vmatpush2.xpose.msra.mxu0 0.0
    %483 = vmatprep.subr.mxu0 0.0
    %484 = vmatpush2.xpose.msra.mxu0 0.0
    %485 = vmatprep.subr.mxu0 0.0
    %486 = vmatpush2.xpose.msra.mxu0 0.0
    %487 = vmatprep.subr.mxu0 0.0
    %488 = vmatpush2.xpose.msra.mxu0 0.0
    %489 = vmatprep.subr.mxu0 0.0
    %490 = vmatpush2.xpose.msra.mxu0 0.0
    %491 = vmatprep.subr.mxu0 0.0
    %492 = vmatpush2.xpose.msra.mxu0 0.0
    %493 = vmatprep.mubr.f32.mxu0 0.0
    %494 = vmatmul.mubr.f32.gmra.mxu0 %v427
    %v495 = vpop.f32.mrf.mxu0
    %v496 = vadd.f32 0.0, %v495
    %v497 = vpop.f32.mrf.mxu0
    %498 = vdwg.mxu0
    %499 = vmatprep.subr.mxu0 0.0
    %500 = vmatpush1.xpose.msra.mxu0 0.0
    %501 = vmatprep.subr.mxu0 0.0
    %502 = vmatpush1.xpose.msra.mxu0 0.0
    %503 = vmatprep.subr.mxu0 0.0
    %504 = vmatpush1.xpose.msra.mxu0 0.0
    %505 = vmatprep.subr.mxu0 0.0
    %506 = vmatpush1.xpose.msra.mxu0 0.0
    %507 = vmatprep.subr.mxu0 0.0
    %508 = vmatpush1.xpose.msra.mxu0 0.0
    %509 = vmatprep.subr.mxu0 0.0
    %510 = vmatpush1.xpose.msra.mxu0 0.0
    %511 = vmatprep.subr.mxu0 0.0
    %512 = vmatpush1.xpose.msra.mxu0 0.0
    %513 = vmatprep.subr.mxu0 0.0
    %514 = vmatpush1.xpose.msra.mxu0 0.0
    %515 = vmatprep.subr.mxu0 0.0
    %516 = vmatpush1.xpose.msra.mxu0 0.0
    %517 = vmatprep.subr.mxu0 0.0
    %518 = vmatpush1.xpose.msra.mxu0 0.0
    %519 = vmatprep.subr.mxu0 0.0
    %520 = vmatpush1.xpose.msra.mxu0 0.0
    %521 = vmatprep.subr.mxu0 0.0
    %522 = vmatpush1.xpose.msra.mxu0 0.0
    %523 = vmatprep.subr.mxu0 0.0
    %524 = vmatpush1.xpose.msra.mxu0 0.0
    %525 = vmatprep.subr.mxu0 0.0
    %526 = vmatpush1.xpose.msra.mxu0 0.0
    %527 = vmatprep.subr.mxu0 0.0
    %528 = vmatpush1.xpose.msra.mxu0 0.0
    %529 = vmatprep.subr.mxu0 0.0
    %530 = vmatpush1.xpose.msra.mxu0 %v350
    %531 = vmatprep.subr.mxu0 0.0
    %532 = vmatpush2.xpose.msra.mxu0 0.0
    %533 = vmatprep.subr.mxu0 0.0
    %534 = vmatpush2.xpose.msra.mxu0 0.0
    %535 = vmatprep.subr.mxu0 0.0
    %536 = vmatpush2.xpose.msra.mxu0 0.0
    %537 = vmatprep.subr.mxu0 0.0
    %538 = vmatpush2.xpose.msra.mxu0 0.0
    %539 = vmatprep.subr.mxu0 0.0
    %540 = vmatpush2.xpose.msra.mxu0 0.0
    %541 = vmatprep.subr.mxu0 0.0
    %542 = vmatpush2.xpose.msra.mxu0 0.0
    %543 = vmatprep.subr.mxu0 0.0
    %544 = vmatpush2.xpose.msra.mxu0 0.0
    %545 = vmatprep.subr.mxu0 0.0
    %546 = vmatpush2.xpose.msra.mxu0 0.0
    %547 = vmatprep.subr.mxu0 0.0
    %548 = vmatpush2.xpose.msra.mxu0 0.0
    %549 = vmatprep.subr.mxu0 0.0
    %550 = vmatpush2.xpose.msra.mxu0 0.0
    %551 = vmatprep.subr.mxu0 0.0
    %552 = vmatpush2.xpose.msra.mxu0 0.0
    %553 = vmatprep.subr.mxu0 0.0
    %554 = vmatpush2.xpose.msra.mxu0 0.0
    %555 = vmatprep.subr.mxu0 0.0
    %556 = vmatpush2.xpose.msra.mxu0 0.0
    %557 = vmatprep.subr.mxu0 0.0
    %558 = vmatpush2.xpose.msra.mxu0 0.0
    %559 = vmatprep.subr.mxu0 0.0
    %560 = vmatpush2.xpose.msra.mxu0 0.0
    %561 = vmatprep.subr.mxu0 0.0
    %562 = vmatpush2.xpose.msra.mxu0 0.0
    %563 = vmatprep.mubr.f32.mxu0 0.0
    %564 = vmatmul.mubr.f32.gmra.mxu0 %v428
    %v565 = vpop.f32.mrf.mxu0
    %v566 = vadd.f32 0.0, %v565
    %v567 = vpop.f32.mrf.mxu0
    %568 = vdwg.mxu0
    %v569 = vsel %vm128, %v496, -inf
    %570 = vmax.xlane.f32.xlu0 %v569
    %v571 = vpop.xlane.xlu0 %570
    %v572 = vsel %vm128, %v566, -inf
    %573 = vmax.xlane.f32.xlu0 %v572
    %v574 = vpop.xlane.xlu0 %573
    %v575 = vsub.f32 %v496, %v571
    %v576 = vsub.f32 %v566, %v574
    %v577 = vmul.f32 %v575, 1.442695
    %v578 = vpow.pop %v577
    %v579 = vmul.f32 %v576, 1.442695
    %v580 = vpow.pop %v579
    %v581 = vsel %vm128, %v578, 0.0
    %582 = vadd.xlane.f32.xlu0 %v581
    %v583 = vpop.xlane.xlu0 %582
    %v584 = vsel %vm128, %v580, 0.0
    %585 = vadd.xlane.f32.xlu0 %v584
    %v586 = vpop.xlane.xlu0 %585
    %v588 = vsel %vm128, %v578, 0
    %590 = vmatprep.subr.mxu0 0.0
    %591 = vmatpush1.msra.mxu0 0.0
    %592 = vmatprep.subr.mxu0 0.0
    %593 = vmatpush1.msra.mxu0 0.0
    %594 = vmatprep.subr.mxu0 0.0
    %595 = vmatpush1.msra.mxu0 0.0
    %596 = vmatprep.subr.mxu0 0.0
    %597 = vmatpush1.msra.mxu0 0.0
    %598 = vmatprep.subr.mxu0 0.0
    %599 = vmatpush1.msra.mxu0 0.0
    %600 = vmatprep.subr.mxu0 0.0
    %601 = vmatpush1.msra.mxu0 0.0
    %602 = vmatprep.subr.mxu0 0.0
    %603 = vmatpush1.msra.mxu0 0.0
    %604 = vmatprep.subr.mxu0 0.0
    %605 = vmatpush1.msra.mxu0 0.0
    %606 = vmatprep.subr.mxu0 0.0
    %607 = vmatpush1.msra.mxu0 0.0
    %608 = vmatprep.subr.mxu0 0.0
    %609 = vmatpush1.msra.mxu0 0.0
    %610 = vmatprep.subr.mxu0 0.0
    %611 = vmatpush1.msra.mxu0 0.0
    %612 = vmatprep.subr.mxu0 0.0
    %613 = vmatpush1.msra.mxu0 0.0
    %614 = vmatprep.subr.mxu0 0.0
    %615 = vmatpush1.msra.mxu0 0.0
    %616 = vmatprep.subr.mxu0 0.0
    %617 = vmatpush1.msra.mxu0 0.0
    %618 = vmatprep.subr.mxu0 0.0
    %619 = vmatpush1.msra.mxu0 0.0
    %620 = vmatprep.subr.mxu0 0.0
    %621 = vmatpush1.msra.mxu0 %v419
    %622 = vmatprep.subr.mxu0 0.0
    %623 = vmatpush2.msra.mxu0 0.0
    %624 = vmatprep.subr.mxu0 0.0
    %625 = vmatpush2.msra.mxu0 0.0
    %626 = vmatprep.subr.mxu0 0.0
    %627 = vmatpush2.msra.mxu0 0.0
    %628 = vmatprep.subr.mxu0 0.0
    %629 = vmatpush2.msra.mxu0 0.0
    %630 = vmatprep.subr.mxu0 0.0
    %631 = vmatpush2.msra.mxu0 0.0
    %632 = vmatprep.subr.mxu0 0.0
    %633 = vmatpush2.msra.mxu0 0.0
    %634 = vmatprep.subr.mxu0 0.0
    %635 = vmatpush2.msra.mxu0 0.0
    %636 = vmatprep.subr.mxu0 0.0
    %637 = vmatpush2.msra.mxu0 0.0
    %638 = vmatprep.subr.mxu0 0.0
    %639 = vmatpush2.msra.mxu0 0.0
    %640 = vmatprep.subr.mxu0 0.0
    %641 = vmatpush2.msra.mxu0 0.0
    %642 = vmatprep.subr.mxu0 0.0
    %643 = vmatpush2.msra.mxu0 0.0
    %644 = vmatprep.subr.mxu0 0.0
    %645 = vmatpush2.msra.mxu0 0.0
    %646 = vmatprep.subr.mxu0 0.0
    %647 = vmatpush2.msra.mxu0 0.0
    %648 = vmatprep.subr.mxu0 0.0
    %649 = vmatpush2.msra.mxu0 0.0
    %650 = vmatprep.subr.mxu0 0.0
    %651 = vmatpush2.msra.mxu0 0.0
    %652 = vmatprep.subr.mxu0 0.0
    %653 = vmatpush2.msra.mxu0 0.0
    %654 = vmatprep.mubr.f32.mxu0 0.0
    %655 = vmatmul.mubr.f32.gmra.mxu0 %v588
    %v656 = vpop.f32.mrf.mxu0
    %v657 = vadd.f32 0.0, %v656
    %v658 = vpop.f32.mrf.mxu0
    %659 = vdwg.mxu0
    %v661 = vsel %vm128, %v580, 0
    %663 = vmatprep.subr.mxu0 0.0
    %664 = vmatpush1.msra.mxu0 0.0
    %665 = vmatprep.subr.mxu0 0.0
    %666 = vmatpush1.msra.mxu0 0.0
    %667 = vmatprep.subr.mxu0 0.0
    %668 = vmatpush1.msra.mxu0 0.0
    %669 = vmatprep.subr.mxu0 0.0
    %670 = vmatpush1.msra.mxu0 0.0
    %671 = vmatprep.subr.mxu0 0.0
    %672 = vmatpush1.msra.mxu0 0.0
    %673 = vmatprep.subr.mxu0 0.0
    %674 = vmatpush1.msra.mxu0 0.0
    %675 = vmatprep.subr.mxu0 0.0
    %676 = vmatpush1.msra.mxu0 0.0
    %677 = vmatprep.subr.mxu0 0.0
    %678 = vmatpush1.msra.mxu0 0.0
    %679 = vmatprep.subr.mxu0 0.0
    %680 = vmatpush1.msra.mxu0 0.0
    %681 = vmatprep.subr.mxu0 0.0
    %682 = vmatpush1.msra.mxu0 0.0
    %683 = vmatprep.subr.mxu0 0.0
    %684 = vmatpush1.msra.mxu0 0.0
    %685 = vmatprep.subr.mxu0 0.0
    %686 = vmatpush1.msra.mxu0 0.0
    %687 = vmatprep.subr.mxu0 0.0
    %688 = vmatpush1.msra.mxu0 0.0
    %689 = vmatprep.subr.mxu0 0.0
    %690 = vmatpush1.msra.mxu0 0.0
    %691 = vmatprep.subr.mxu0 0.0
    %692 = vmatpush1.msra.mxu0 0.0
    %693 = vmatprep.subr.mxu0 0.0
    %694 = vmatpush1.msra.mxu0 %v424
    %695 = vmatprep.subr.mxu0 0.0
    %696 = vmatpush2.msra.mxu0 0.0
    %697 = vmatprep.subr.mxu0 0.0
    %698 = vmatpush2.msra.mxu0 0.0
    %699 = vmatprep.subr.mxu0 0.0
    %700 = vmatpush2.msra.mxu0 0.0
    %701 = vmatprep.subr.mxu0 0.0
    %702 = vmatpush2.msra.mxu0 0.0
    %703 = vmatprep.subr.mxu0 0.0
    %704 = vmatpush2.msra.mxu0 0.0
    %705 = vmatprep.subr.mxu0 0.0
    %706 = vmatpush2.msra.mxu0 0.0
    %707 = vmatprep.subr.mxu0 0.0
    %708 = vmatpush2.msra.mxu0 0.0
    %709 = vmatprep.subr.mxu0 0.0
    %710 = vmatpush2.msra.mxu0 0.0
    %711 = vmatprep.subr.mxu0 0.0
    %712 = vmatpush2.msra.mxu0 0.0
    %713 = vmatprep.subr.mxu0 0.0
    %714 = vmatpush2.msra.mxu0 0.0
    %715 = vmatprep.subr.mxu0 0.0
    %716 = vmatpush2.msra.mxu0 0.0
    %717 = vmatprep.subr.mxu0 0.0
    %718 = vmatpush2.msra.mxu0 0.0
    %719 = vmatprep.subr.mxu0 0.0
    %720 = vmatpush2.msra.mxu0 0.0
    %721 = vmatprep.subr.mxu0 0.0
    %722 = vmatpush2.msra.mxu0 0.0
    %723 = vmatprep.subr.mxu0 0.0
    %724 = vmatpush2.msra.mxu0 0.0
    %725 = vmatprep.subr.mxu0 0.0
    %726 = vmatpush2.msra.mxu0 0.0
    %727 = vmatprep.mubr.f32.mxu0 0.0
    %728 = vmatmul.mubr.f32.gmra.mxu0 %v661
    %v729 = vpop.f32.mrf.mxu0
    %v730 = vadd.f32 0.0, %v729
    %v731 = vpop.f32.mrf.mxu0
    %732 = vdwg.mxu0
    %v733 = vrcp.pop %v583
    %v734 = vrcp.pop %v586
    %v735 = vmul.f32 %v657, %v733
    %v736 = vmul.f32 %v730, %v734
    %s737 = scalar_lea.vmem [#allocation8], 384
    %v738 = vld [vmem:[%s737] sm:$0xff]
    %v739 = vld [vmem:[%s737 + $0x8] sm:$0xff]
    %v740 = vld [vmem:[%s737 + $0x10] sm:$0xff]
    %v741 = vld [vmem:[%s737 + $0x18] sm:$0xff]
    %v742 = vld [vmem:[%s737 + $0x20] sm:$0xff]
    %v743 = vld [vmem:[%s737 + $0x28] sm:$0xff]
    %v744 = vld [vmem:[%s737 + $0x30] sm:$0xff]
    %v745 = vld [vmem:[%s737 + $0x38] sm:$0xff]
    %v746 = vld [vmem:[%s737 + $0x40] sm:$0xff]
    %v747 = vld [vmem:[%s737 + $0x48] sm:$0xff]
    %v748 = vld [vmem:[%s737 + $0x50] sm:$0xff]
    %v749 = vld [vmem:[%s737 + $0x58] sm:$0xff]
    %v750 = vld [vmem:[%s737 + $0x60] sm:$0xff]
    %v751 = vld [vmem:[%s737 + $0x68] sm:$0xff]
    %v752 = vld [vmem:[%s737 + $0x70] sm:$0xff]
    %v753 = vld [vmem:[%s737 + $0x78] sm:$0xff]
    %v754 = vld [vmem:[%s737 + $0x80] sm:$0xff]
    %v755 = vld [vmem:[%s737 + $0x88] sm:$0xff]
    %v756 = vld [vmem:[%s737 + $0x90] sm:$0xff]
    %v757 = vld [vmem:[%s737 + $0x98] sm:$0xff]
    %v758 = vld [vmem:[%s737 + $0xa0] sm:$0xff]
    %v759 = vld [vmem:[%s737 + $0xa8] sm:$0xff]
    %v760 = vld [vmem:[%s737 + $0xb0] sm:$0xff]
    %v761 = vld [vmem:[%s737 + $0xb8] sm:$0xff]
    %v762 = vld [vmem:[%s737 + $0xc0] sm:$0xff]
    %v763 = vld [vmem:[%s737 + $0xc8] sm:$0xff]
    %v764 = vld [vmem:[%s737 + $0xd0] sm:$0xff]
    %v765 = vld [vmem:[%s737 + $0xd8] sm:$0xff]
    %v766 = vld [vmem:[%s737 + $0xe0] sm:$0xff]
    %v767 = vld [vmem:[%s737 + $0xe8] sm:$0xff]
    %v768 = vld [vmem:[%s737 + $0xf0] sm:$0xff]
    %v769 = vld [vmem:[%s737 + $0xf8] sm:$0xff]
    %v770 = vld [vmem:[%s737 + $0x100] sm:$0xff]
    %v771 = vld [vmem:[%s737 + $0x108] sm:$0xff]
    %v772 = vld [vmem:[%s737 + $0x110] sm:$0xff]
    %v773 = vld [vmem:[%s737 + $0x118] sm:$0xff]
    %v774 = vld [vmem:[%s737 + $0x120] sm:$0xff]
    %v775 = vld [vmem:[%s737 + $0x128] sm:$0xff]
    %v776 = vld [vmem:[%s737 + $0x130] sm:$0xff]
    %v777 = vld [vmem:[%s737 + $0x138] sm:$0xff]
    %v778 = vld [vmem:[%s737 + $0x140] sm:$0xff]
    %v779 = vld [vmem:[%s737 + $0x148] sm:$0xff]
    %v780 = vld [vmem:[%s737 + $0x150] sm:$0xff]
    %v781 = vld [vmem:[%s737 + $0x158] sm:$0xff]
    %v782 = vld [vmem:[%s737 + $0x160] sm:$0xff]
    %v783 = vld [vmem:[%s737 + $0x168] sm:$0xff]
    %v784 = vld [vmem:[%s737 + $0x170] sm:$0xff]
    %v785 = vld [vmem:[%s737 + $0x178] sm:$0xff]
    %s786 = scalar_lea.vmem [#allocation10], 3
    %v787 = vld [vmem:[%s786] sm:$0x7]
    %v789 = vlaneseq
    %v790 = vshrl.u32 %v789, 7
    %v791 = vsub.s32 0, %v790
    %v792 = vrot.slane %v787, %v791
    %v793 = vlaneseq
    %v794 = vshrl.u32 %v793, 7
    %v795 = vsub.s32 1, %v794
    %v796 = vrot.slane %v787, %v795
    %v797 = vlaneseq
    %v798 = vshrl.u32 %v797, 7
    %v799 = vsub.s32 2, %v798
    %v800 = vrot.slane %v787, %v799
    %804 = vmatprep.subr.mxu0 %v784
    %805 = vmatpush1.msra.mxu0 %v783
    %806 = vmatprep.subr.mxu0 %v781
    %807 = vmatpush1.msra.mxu0 %v780
    %808 = vmatprep.subr.mxu0 %v778
    %809 = vmatpush1.msra.mxu0 %v777
    %810 = vmatprep.subr.mxu0 %v775
    %811 = vmatpush1.msra.mxu0 %v774
    %812 = vmatprep.subr.mxu0 %v772
    %813 = vmatpush1.msra.mxu0 %v771
    %814 = vmatprep.subr.mxu0 %v769
    %815 = vmatpush1.msra.mxu0 %v768
    %816 = vmatprep.subr.mxu0 %v766
    %817 = vmatpush1.msra.mxu0 %v765
    %818 = vmatprep.subr.mxu0 %v763
    %819 = vmatpush1.msra.mxu0 %v762
    %820 = vmatprep.subr.mxu0 %v760
    %821 = vmatpush1.msra.mxu0 %v759
    %822 = vmatprep.subr.mxu0 %v757
    %823 = vmatpush1.msra.mxu0 %v756
    %824 = vmatprep.subr.mxu0 %v754
    %825 = vmatpush1.msra.mxu0 %v753
    %826 = vmatprep.subr.mxu0 %v751
    %827 = vmatpush1.msra.mxu0 %v750
    %828 = vmatprep.subr.mxu0 %v748
    %829 = vmatpush1.msra.mxu0 %v747
    %830 = vmatprep.subr.mxu0 %v745
    %831 = vmatpush1.msra.mxu0 %v744
    %832 = vmatprep.subr.mxu0 %v742
    %833 = vmatpush1.msra.mxu0 %v741
    %834 = vmatprep.subr.mxu0 %v739
    %835 = vmatpush1.msra.mxu0 %v738
    %836 = vmatprep.subr.mxu0 0.0
    %837 = vmatpush2.msra.mxu0 0.0
    %838 = vmatprep.subr.mxu0 0.0
    %839 = vmatpush2.msra.mxu0 0.0
    %840 = vmatprep.subr.mxu0 0.0
    %841 = vmatpush2.msra.mxu0 0.0
    %842 = vmatprep.subr.mxu0 0.0
    %843 = vmatpush2.msra.mxu0 0.0
    %844 = vmatprep.subr.mxu0 0.0
    %845 = vmatpush2.msra.mxu0 0.0
    %846 = vmatprep.subr.mxu0 0.0
    %847 = vmatpush2.msra.mxu0 0.0
    %848 = vmatprep.subr.mxu0 0.0
    %849 = vmatpush2.msra.mxu0 0.0
    %850 = vmatprep.subr.mxu0 0.0
    %851 = vmatpush2.msra.mxu0 0.0
    %852 = vmatprep.subr.mxu0 0.0
    %853 = vmatpush2.msra.mxu0 0.0
    %854 = vmatprep.subr.mxu0 0.0
    %855 = vmatpush2.msra.mxu0 0.0
    %856 = vmatprep.subr.mxu0 0.0
    %857 = vmatpush2.msra.mxu0 0.0
    %858 = vmatprep.subr.mxu0 0.0
    %859 = vmatpush2.msra.mxu0 0.0
    %860 = vmatprep.subr.mxu0 0.0
    %861 = vmatpush2.msra.mxu0 0.0
    %862 = vmatprep.subr.mxu0 0.0
    %863 = vmatpush2.msra.mxu0 0.0
    %864 = vmatprep.subr.mxu0 0.0
    %865 = vmatpush2.msra.mxu0 0.0
    %866 = vmatprep.subr.mxu0 0.0
    %867 = vmatpush2.msra.mxu0 0.0
    %868 = vmatprep.mubr.f32.mxu0 0.0
    %869 = vmatmul.mubr.f32.gmra.mxu0 %v735
    %v870 = vpop.f32.mrf.mxu0
    %v871 = vadd.f32 %v792, %v870
    %v872 = vpop.f32.mrf.mxu0
    %v873 = vadd.f32 %v796, %v872
    %874 = vmatprep.mubr.f32.mxu0 0.0
    %875 = vmatmul.mubr.f32.gmra.mxu0 %v736
    %v876 = vpop.f32.mrf.mxu0
    %v877 = vadd.f32 %v792, %v876
    %v878 = vpop.f32.mrf.mxu0
    %v879 = vadd.f32 %v796, %v878
    %880 = vdwg.mxu0
    %881 = vmatprep.subr.mxu0 0.0
    %882 = vmatpush1.msra.mxu0 %v785
    %883 = vmatprep.subr.mxu0 0.0
    %884 = vmatpush1.msra.mxu0 %v782
    %885 = vmatprep.subr.mxu0 0.0
    %886 = vmatpush1.msra.mxu0 %v779
    %887 = vmatprep.subr.mxu0 0.0
    %888 = vmatpush1.msra.mxu0 %v776
    %889 = vmatprep.subr.mxu0 0.0
    %890 = vmatpush1.msra.mxu0 %v773
    %891 = vmatprep.subr.mxu0 0.0
    %892 = vmatpush1.msra.mxu0 %v770
    %893 = vmatprep.subr.mxu0 0.0
    %894 = vmatpush1.msra.mxu0 %v767
    %895 = vmatprep.subr.mxu0 0.0
    %896 = vmatpush1.msra.mxu0 %v764
    %897 = vmatprep.subr.mxu0 0.0
    %898 = vmatpush1.msra.mxu0 %v761
    %899 = vmatprep.subr.mxu0 0.0
    %900 = vmatpush1.msra.mxu0 %v758
    %901 = vmatprep.subr.mxu0 0.0
    %902 = vmatpush1.msra.mxu0 %v755
    %903 = vmatprep.subr.mxu0 0.0
    %904 = vmatpush1.msra.mxu0 %v752
    %905 = vmatprep.subr.mxu0 0.0
    %906 = vmatpush1.msra.mxu0 %v749
    %907 = vmatprep.subr.mxu0 0.0
    %908 = vmatpush1.msra.mxu0 %v746
    %909 = vmatprep.subr.mxu0 0.0
    %910 = vmatpush1.msra.mxu0 %v743
    %911 = vmatprep.subr.mxu0 0.0
    %912 = vmatpush1.msra.mxu0 %v740
    %913 = vmatprep.subr.mxu0 0.0
    %914 = vmatpush2.msra.mxu0 0.0
    %915 = vmatprep.subr.mxu0 0.0
    %916 = vmatpush2.msra.mxu0 0.0
    %917 = vmatprep.subr.mxu0 0.0
    %918 = vmatpush2.msra.mxu0 0.0
    %919 = vmatprep.subr.mxu0 0.0
    %920 = vmatpush2.msra.mxu0 0.0
    %921 = vmatprep.subr.mxu0 0.0
    %922 = vmatpush2.msra.mxu0 0.0
    %923 = vmatprep.subr.mxu0 0.0
    %924 = vmatpush2.msra.mxu0 0.0
    %925 = vmatprep.subr.mxu0 0.0
    %926 = vmatpush2.msra.mxu0 0.0
    %927 = vmatprep.subr.mxu0 0.0
    %928 = vmatpush2.msra.mxu0 0.0
    %929 = vmatprep.subr.mxu0 0.0
    %930 = vmatpush2.msra.mxu0 0.0
    %931 = vmatprep.subr.mxu0 0.0
    %932 = vmatpush2.msra.mxu0 0.0
    %933 = vmatprep.subr.mxu0 0.0
    %934 = vmatpush2.msra.mxu0 0.0
    %935 = vmatprep.subr.mxu0 0.0
    %936 = vmatpush2.msra.mxu0 0.0
    %937 = vmatprep.subr.mxu0 0.0
    %938 = vmatpush2.msra.mxu0 0.0
    %939 = vmatprep.subr.mxu0 0.0
    %940 = vmatpush2.msra.mxu0 0.0
    %941 = vmatprep.subr.mxu0 0.0
    %942 = vmatpush2.msra.mxu0 0.0
    %943 = vmatprep.subr.mxu0 0.0
    %944 = vmatpush2.msra.mxu0 0.0
    %945 = vmatprep.mubr.f32.mxu0 0.0
    %946 = vmatmul.mubr.f32.gmra.mxu0 %v735
    %v947 = vpop.f32.mrf.mxu0
    %v948 = vadd.f32 %v800, %v947
    %v949 = vpop.f32.mrf.mxu0
    %950 = vmatprep.mubr.f32.mxu0 0.0
    %951 = vmatmul.mubr.f32.gmra.mxu0 %v736
    %v952 = vpop.f32.mrf.mxu0
    %v953 = vadd.f32 %v800, %v952
    %v954 = vpop.f32.mrf.mxu0
    %955 = vdwg.mxu0
    %v956 = vmul.f32 %v871, 0.33333334
    %v957 = vmul.f32 %v877, 0.33333334
    %958 = vmatprep.subr.mxu0 0.0
    %959 = vmatpush1.xpose.msra.mxu0 0.0
    %960 = vmatprep.subr.mxu0 0.0
    %961 = vmatpush1.xpose.msra.mxu0 0.0
    %962 = vmatprep.subr.mxu0 0.0
    %963 = vmatpush1.xpose.msra.mxu0 0.0
    %964 = vmatprep.subr.mxu0 0.0
    %965 = vmatpush1.xpose.msra.mxu0 0.0
    %966 = vmatprep.subr.mxu0 0.0
    %967 = vmatpush1.xpose.msra.mxu0 0.0
    %968 = vmatprep.subr.mxu0 0.0
    %969 = vmatpush1.xpose.msra.mxu0 0.0
    %970 = vmatprep.subr.mxu0 0.0
    %971 = vmatpush1.xpose.msra.mxu0 0.0
    %972 = vmatprep.subr.mxu0 0.0
    %973 = vmatpush1.xpose.msra.mxu0 0.0
    %974 = vmatprep.subr.mxu0 0.0
    %975 = vmatpush1.xpose.msra.mxu0 0.0
    %976 = vmatprep.subr.mxu0 0.0
    %977 = vmatpush1.xpose.msra.mxu0 0.0
    %978 = vmatprep.subr.mxu0 0.0
    %979 = vmatpush1.xpose.msra.mxu0 0.0
    %980 = vmatprep.subr.mxu0 0.0
    %981 = vmatpush1.xpose.msra.mxu0 0.0
    %982 = vmatprep.subr.mxu0 0.0
    %983 = vmatpush1.xpose.msra.mxu0 0.0
    %984 = vmatprep.subr.mxu0 0.0
    %985 = vmatpush1.xpose.msra.mxu0 0.0
    %986 = vmatprep.subr.mxu0 0.0
    %987 = vmatpush1.xpose.msra.mxu0 0.0
    %988 = vmatprep.subr.mxu0 0.0
    %989 = vmatpush1.xpose.msra.mxu0 %v873
    %990 = vmatprep.subr.mxu0 0.0
    %991 = vmatpush2.xpose.msra.mxu0 0.0
    %992 = vmatprep.subr.mxu0 0.0
    %993 = vmatpush2.xpose.msra.mxu0 0.0
    %994 = vmatprep.subr.mxu0 0.0
    %995 = vmatpush2.xpose.msra.mxu0 0.0
    %996 = vmatprep.subr.mxu0 0.0
    %997 = vmatpush2.xpose.msra.mxu0 0.0
    %998 = vmatprep.subr.mxu0 0.0
    %999 = vmatpush2.xpose.msra.mxu0 0.0
    %1000 = vmatprep.subr.mxu0 0.0
    %1001 = vmatpush2.xpose.msra.mxu0 0.0
    %1002 = vmatprep.subr.mxu0 0.0
    %1003 = vmatpush2.xpose.msra.mxu0 0.0
    %1004 = vmatprep.subr.mxu0 0.0
    %1005 = vmatpush2.xpose.msra.mxu0 0.0
    %1006 = vmatprep.subr.mxu0 0.0
    %1007 = vmatpush2.xpose.msra.mxu0 0.0
    %1008 = vmatprep.subr.mxu0 0.0
    %1009 = vmatpush2.xpose.msra.mxu0 0.0
    %1010 = vmatprep.subr.mxu0 0.0
    %1011 = vmatpush2.xpose.msra.mxu0 0.0
    %1012 = vmatprep.subr.mxu0 0.0
    %1013 = vmatpush2.xpose.msra.mxu0 0.0
    %1014 = vmatprep.subr.mxu0 0.0
    %1015 = vmatpush2.xpose.msra.mxu0 0.0
    %1016 = vmatprep.subr.mxu0 0.0
    %1017 = vmatpush2.xpose.msra.mxu0 0.0
    %1018 = vmatprep.subr.mxu0 0.0
    %1019 = vmatpush2.xpose.msra.mxu0 0.0
    %1020 = vmatprep.subr.mxu0 0.0
    %1021 = vmatpush2.xpose.msra.mxu0 0.0
    %1022 = vmatprep.mubr.f32.mxu0 0.0
    %1023 = vmatmul.mubr.f32.gmra.mxu0 %v956
    %v1024 = vpop.f32.mrf.mxu0
    %v1025 = vadd.f32 0.0, %v1024
    %v1026 = vpop.f32.mrf.mxu0
    %1027 = vdwg.mxu0
    %1028 = vmatprep.subr.mxu0 0.0
    %1029 = vmatpush1.xpose.msra.mxu0 0.0
    %1030 = vmatprep.subr.mxu0 0.0
    %1031 = vmatpush1.xpose.msra.mxu0 0.0
    %1032 = vmatprep.subr.mxu0 0.0
    %1033 = vmatpush1.xpose.msra.mxu0 0.0
    %1034 = vmatprep.subr.mxu0 0.0
    %1035 = vmatpush1.xpose.msra.mxu0 0.0
    %1036 = vmatprep.subr.mxu0 0.0
    %1037 = vmatpush1.xpose.msra.mxu0 0.0
    %1038 = vmatprep.subr.mxu0 0.0
    %1039 = vmatpush1.xpose.msra.mxu0 0.0
    %1040 = vmatprep.subr.mxu0 0.0
    %1041 = vmatpush1.xpose.msra.mxu0 0.0
    %1042 = vmatprep.subr.mxu0 0.0
    %1043 = vmatpush1.xpose.msra.mxu0 0.0
    %1044 = vmatprep.subr.mxu0 0.0
    %1045 = vmatpush1.xpose.msra.mxu0 0.0
    %1046 = vmatprep.subr.mxu0 0.0
    %1047 = vmatpush1.xpose.msra.mxu0 0.0
    %1048 = vmatprep.subr.mxu0 0.0
    %1049 = vmatpush1.xpose.msra.mxu0 0.0
    %1050 = vmatprep.subr.mxu0 0.0
    %1051 = vmatpush1.xpose.msra.mxu0 0.0
    %1052 = vmatprep.subr.mxu0 0.0
    %1053 = vmatpush1.xpose.msra.mxu0 0.0
    %1054 = vmatprep.subr.mxu0 0.0
    %1055 = vmatpush1.xpose.msra.mxu0 0.0
    %1056 = vmatprep.subr.mxu0 0.0
    %1057 = vmatpush1.xpose.msra.mxu0 0.0
    %1058 = vmatprep.subr.mxu0 0.0
    %1059 = vmatpush1.xpose.msra.mxu0 %v879
    %1060 = vmatprep.subr.mxu0 0.0
    %1061 = vmatpush2.xpose.msra.mxu0 0.0
    %1062 = vmatprep.subr.mxu0 0.0
    %1063 = vmatpush2.xpose.msra.mxu0 0.0
    %1064 = vmatprep.subr.mxu0 0.0
    %1065 = vmatpush2.xpose.msra.mxu0 0.0
    %1066 = vmatprep.subr.mxu0 0.0
    %1067 = vmatpush2.xpose.msra.mxu0 0.0
    %1068 = vmatprep.subr.mxu0 0.0
    %1069 = vmatpush2.xpose.msra.mxu0 0.0
    %1070 = vmatprep.subr.mxu0 0.0
    %1071 = vmatpush2.xpose.msra.mxu0 0.0
    %1072 = vmatprep.subr.mxu0 0.0
    %1073 = vmatpush2.xpose.msra.mxu0 0.0
    %1074 = vmatprep.subr.mxu0 0.0
    %1075 = vmatpush2.xpose.msra.mxu0 0.0
    %1076 = vmatprep.subr.mxu0 0.0
    %1077 = vmatpush2.xpose.msra.mxu0 0.0
    %1078 = vmatprep.subr.mxu0 0.0
    %1079 = vmatpush2.xpose.msra.mxu0 0.0
    %1080 = vmatprep.subr.mxu0 0.0
    %1081 = vmatpush2.xpose.msra.mxu0 0.0
    %1082 = vmatprep.subr.mxu0 0.0
    %1083 = vmatpush2.xpose.msra.mxu0 0.0
    %1084 = vmatprep.subr.mxu0 0.0
    %1085 = vmatpush2.xpose.msra.mxu0 0.0
    %1086 = vmatprep.subr.mxu0 0.0
    %1087 = vmatpush2.xpose.msra.mxu0 0.0
    %1088 = vmatprep.subr.mxu0 0.0
    %1089 = vmatpush2.xpose.msra.mxu0 0.0
    %1090 = vmatprep.subr.mxu0 0.0
    %1091 = vmatpush2.xpose.msra.mxu0 0.0
    %1092 = vmatprep.mubr.f32.mxu0 0.0
    %1093 = vmatmul.mubr.f32.gmra.mxu0 %v957
    %v1094 = vpop.f32.mrf.mxu0
    %v1095 = vadd.f32 0.0, %v1094
    %v1096 = vpop.f32.mrf.mxu0
    %1097 = vdwg.mxu0
    %v1098 = vsel %vm128, %v1025, -inf
    %1099 = vmax.xlane.f32.xlu0 %v1098
    %v1100 = vpop.xlane.xlu0 %1099
    %v1101 = vsel %vm128, %v1095, -inf
    %1102 = vmax.xlane.f32.xlu0 %v1101
    %v1103 = vpop.xlane.xlu0 %1102
    %v1104 = vsub.f32 %v1025, %v1100
    %v1105 = vsub.f32 %v1095, %v1103
    %v1106 = vmul.f32 %v1104, 1.442695
    %v1107 = vpow.pop %v1106
    %v1108 = vmul.f32 %v1105, 1.442695
    %v1109 = vpow.pop %v1108
    %v1110 = vsel %vm128, %v1107, 0.0
    %1111 = vadd.xlane.f32.xlu0 %v1110
    %v1112 = vpop.xlane.xlu0 %1111
    %v1113 = vsel %vm128, %v1109, 0.0
    %1114 = vadd.xlane.f32.xlu0 %v1113
    %v1115 = vpop.xlane.xlu0 %1114
    %v1117 = vsel %vm128, %v1107, 0
    %1119 = vmatprep.subr.mxu0 0.0
    %1120 = vmatpush1.msra.mxu0 0.0
    %1121 = vmatprep.subr.mxu0 0.0
    %1122 = vmatpush1.msra.mxu0 0.0
    %1123 = vmatprep.subr.mxu0 0.0
    %1124 = vmatpush1.msra.mxu0 0.0
    %1125 = vmatprep.subr.mxu0 0.0
    %1126 = vmatpush1.msra.mxu0 0.0
    %1127 = vmatprep.subr.mxu0 0.0
    %1128 = vmatpush1.msra.mxu0 0.0
    %1129 = vmatprep.subr.mxu0 0.0
    %1130 = vmatpush1.msra.mxu0 0.0
    %1131 = vmatprep.subr.mxu0 0.0
    %1132 = vmatpush1.msra.mxu0 0.0
    %1133 = vmatprep.subr.mxu0 0.0
    %1134 = vmatpush1.msra.mxu0 0.0
    %1135 = vmatprep.subr.mxu0 0.0
    %1136 = vmatpush1.msra.mxu0 0.0
    %1137 = vmatprep.subr.mxu0 0.0
    %1138 = vmatpush1.msra.mxu0 0.0
    %1139 = vmatprep.subr.mxu0 0.0
    %1140 = vmatpush1.msra.mxu0 0.0
    %1141 = vmatprep.subr.mxu0 0.0
    %1142 = vmatpush1.msra.mxu0 0.0
    %1143 = vmatprep.subr.mxu0 0.0
    %1144 = vmatpush1.msra.mxu0 0.0
    %1145 = vmatprep.subr.mxu0 0.0
    %1146 = vmatpush1.msra.mxu0 0.0
    %1147 = vmatprep.subr.mxu0 0.0
    %1148 = vmatpush1.msra.mxu0 0.0
    %1149 = vmatprep.subr.mxu0 0.0
    %1150 = vmatpush1.msra.mxu0 %v948
    %1151 = vmatprep.subr.mxu0 0.0
    %1152 = vmatpush2.msra.mxu0 0.0
    %1153 = vmatprep.subr.mxu0 0.0
    %1154 = vmatpush2.msra.mxu0 0.0
    %1155 = vmatprep.subr.mxu0 0.0
    %1156 = vmatpush2.msra.mxu0 0.0
    %1157 = vmatprep.subr.mxu0 0.0
    %1158 = vmatpush2.msra.mxu0 0.0
    %1159 = vmatprep.subr.mxu0 0.0
    %1160 = vmatpush2.msra.mxu0 0.0
    %1161 = vmatprep.subr.mxu0 0.0
    %1162 = vmatpush2.msra.mxu0 0.0
    %1163 = vmatprep.subr.mxu0 0.0
    %1164 = vmatpush2.msra.mxu0 0.0
    %1165 = vmatprep.subr.mxu0 0.0
    %1166 = vmatpush2.msra.mxu0 0.0
    %1167 = vmatprep.subr.mxu0 0.0
    %1168 = vmatpush2.msra.mxu0 0.0
    %1169 = vmatprep.subr.mxu0 0.0
    %1170 = vmatpush2.msra.mxu0 0.0
    %1171 = vmatprep.subr.mxu0 0.0
    %1172 = vmatpush2.msra.mxu0 0.0
    %1173 = vmatprep.subr.mxu0 0.0
    %1174 = vmatpush2.msra.mxu0 0.0
    %1175 = vmatprep.subr.mxu0 0.0
    %1176 = vmatpush2.msra.mxu0 0.0
    %1177 = vmatprep.subr.mxu0 0.0
    %1178 = vmatpush2.msra.mxu0 0.0
    %1179 = vmatprep.subr.mxu0 0.0
    %1180 = vmatpush2.msra.mxu0 0.0
    %1181 = vmatprep.subr.mxu0 0.0
    %1182 = vmatpush2.msra.mxu0 0.0
    %1183 = vmatprep.mubr.f32.mxu0 0.0
    %1184 = vmatmul.mubr.f32.gmra.mxu0 %v1117
    %v1185 = vpop.f32.mrf.mxu0
    %v1186 = vadd.f32 0.0, %v1185
    %v1187 = vpop.f32.mrf.mxu0
    %1188 = vdwg.mxu0
    %v1190 = vsel %vm128, %v1109, 0
    %1192 = vmatprep.subr.mxu0 0.0
    %1193 = vmatpush1.msra.mxu0 0.0
    %1194 = vmatprep.subr.mxu0 0.0
    %1195 = vmatpush1.msra.mxu0 0.0
    %1196 = vmatprep.subr.mxu0 0.0
    %1197 = vmatpush1.msra.mxu0 0.0
    %1198 = vmatprep.subr.mxu0 0.0
    %1199 = vmatpush1.msra.mxu0 0.0
    %1200 = vmatprep.subr.mxu0 0.0
    %1201 = vmatpush1.msra.mxu0 0.0
    %1202 = vmatprep.subr.mxu0 0.0
    %1203 = vmatpush1.msra.mxu0 0.0
    %1204 = vmatprep.subr.mxu0 0.0
    %1205 = vmatpush1.msra.mxu0 0.0
    %1206 = vmatprep.subr.mxu0 0.0
    %1207 = vmatpush1.msra.mxu0 0.0
    %1208 = vmatprep.subr.mxu0 0.0
    %1209 = vmatpush1.msra.mxu0 0.0
    %1210 = vmatprep.subr.mxu0 0.0
    %1211 = vmatpush1.msra.mxu0 0.0
    %1212 = vmatprep.subr.mxu0 0.0
    %1213 = vmatpush1.msra.mxu0 0.0
    %1214 = vmatprep.subr.mxu0 0.0
    %1215 = vmatpush1.msra.mxu0 0.0
    %1216 = vmatprep.subr.mxu0 0.0
    %1217 = vmatpush1.msra.mxu0 0.0
    %1218 = vmatprep.subr.mxu0 0.0
    %1219 = vmatpush1.msra.mxu0 0.0
    %1220 = vmatprep.subr.mxu0 0.0
    %1221 = vmatpush1.msra.mxu0 0.0
    %1222 = vmatprep.subr.mxu0 0.0
    %1223 = vmatpush1.msra.mxu0 %v953
    %1224 = vmatprep.subr.mxu0 0.0
    %1225 = vmatpush2.msra.mxu0 0.0
    %1226 = vmatprep.subr.mxu0 0.0
    %1227 = vmatpush2.msra.mxu0 0.0
    %1228 = vmatprep.subr.mxu0 0.0
    %1229 = vmatpush2.msra.mxu0 0.0
    %1230 = vmatprep.subr.mxu0 0.0
    %1231 = vmatpush2.msra.mxu0 0.0
    %1232 = vmatprep.subr.mxu0 0.0
    %1233 = vmatpush2.msra.mxu0 0.0
    %1234 = vmatprep.subr.mxu0 0.0
    %1235 = vmatpush2.msra.mxu0 0.0
    %1236 = vmatprep.subr.mxu0 0.0
    %1237 = vmatpush2.msra.mxu0 0.0
    %1238 = vmatprep.subr.mxu0 0.0
    %1239 = vmatpush2.msra.mxu0 0.0
    %1240 = vmatprep.subr.mxu0 0.0
    %1241 = vmatpush2.msra.mxu0 0.0
    %1242 = vmatprep.subr.mxu0 0.0
    %1243 = vmatpush2.msra.mxu0 0.0
    %1244 = vmatprep.subr.mxu0 0.0
    %1245 = vmatpush2.msra.mxu0 0.0
    %1246 = vmatprep.subr.mxu0 0.0
    %1247 = vmatpush2.msra.mxu0 0.0
    %1248 = vmatprep.subr.mxu0 0.0
    %1249 = vmatpush2.msra.mxu0 0.0
    %1250 = vmatprep.subr.mxu0 0.0
    %1251 = vmatpush2.msra.mxu0 0.0
    %1252 = vmatprep.subr.mxu0 0.0
    %1253 = vmatpush2.msra.mxu0 0.0
    %1254 = vmatprep.subr.mxu0 0.0
    %1255 = vmatpush2.msra.mxu0 0.0
    %1256 = vmatprep.mubr.f32.mxu0 0.0
    %1257 = vmatmul.mubr.f32.gmra.mxu0 %v1190
    %v1258 = vpop.f32.mrf.mxu0
    %v1259 = vadd.f32 0.0, %v1258
    %v1260 = vpop.f32.mrf.mxu0
    %1261 = vdwg.mxu0
    %v1262 = vrcp.pop %v1112
    %v1263 = vrcp.pop %v1115
    %v1264 = vmul.f32 %v1186, %v1262
    %v1265 = vmul.f32 %v1259, %v1263
    %s1266 = scalar_lea.vmem [#allocation8], 768
    %v1267 = vld [vmem:[%s1266] sm:$0xff]
    %v1268 = vld [vmem:[%s1266 + $0x8] sm:$0xff]
    %v1269 = vld [vmem:[%s1266 + $0x10] sm:$0xff]
    %v1270 = vld [vmem:[%s1266 + $0x18] sm:$0xff]
    %v1271 = vld [vmem:[%s1266 + $0x20] sm:$0xff]
    %v1272 = vld [vmem:[%s1266 + $0x28] sm:$0xff]
    %v1273 = vld [vmem:[%s1266 + $0x30] sm:$0xff]
    %v1274 = vld [vmem:[%s1266 + $0x38] sm:$0xff]
    %v1275 = vld [vmem:[%s1266 + $0x40] sm:$0xff]
    %v1276 = vld [vmem:[%s1266 + $0x48] sm:$0xff]
    %v1277 = vld [vmem:[%s1266 + $0x50] sm:$0xff]
    %v1278 = vld [vmem:[%s1266 + $0x58] sm:$0xff]
    %v1279 = vld [vmem:[%s1266 + $0x60] sm:$0xff]
    %v1280 = vld [vmem:[%s1266 + $0x68] sm:$0xff]
    %v1281 = vld [vmem:[%s1266 + $0x70] sm:$0xff]
    %v1282 = vld [vmem:[%s1266 + $0x78] sm:$0xff]
    %v1283 = vld [vmem:[%s1266 + $0x80] sm:$0xff]
    %v1284 = vld [vmem:[%s1266 + $0x88] sm:$0xff]
    %v1285 = vld [vmem:[%s1266 + $0x90] sm:$0xff]
    %v1286 = vld [vmem:[%s1266 + $0x98] sm:$0xff]
    %v1287 = vld [vmem:[%s1266 + $0xa0] sm:$0xff]
    %v1288 = vld [vmem:[%s1266 + $0xa8] sm:$0xff]
    %v1289 = vld [vmem:[%s1266 + $0xb0] sm:$0xff]
    %v1290 = vld [vmem:[%s1266 + $0xb8] sm:$0xff]
    %v1291 = vld [vmem:[%s1266 + $0xc0] sm:$0xff]
    %v1292 = vld [vmem:[%s1266 + $0xc8] sm:$0xff]
    %v1293 = vld [vmem:[%s1266 + $0xd0] sm:$0xff]
    %v1294 = vld [vmem:[%s1266 + $0xd8] sm:$0xff]
    %v1295 = vld [vmem:[%s1266 + $0xe0] sm:$0xff]
    %v1296 = vld [vmem:[%s1266 + $0xe8] sm:$0xff]
    %v1297 = vld [vmem:[%s1266 + $0xf0] sm:$0xff]
    %v1298 = vld [vmem:[%s1266 + $0xf8] sm:$0xff]
    %v1299 = vld [vmem:[%s1266 + $0x100] sm:$0xff]
    %v1300 = vld [vmem:[%s1266 + $0x108] sm:$0xff]
    %v1301 = vld [vmem:[%s1266 + $0x110] sm:$0xff]
    %v1302 = vld [vmem:[%s1266 + $0x118] sm:$0xff]
    %v1303 = vld [vmem:[%s1266 + $0x120] sm:$0xff]
    %v1304 = vld [vmem:[%s1266 + $0x128] sm:$0xff]
    %v1305 = vld [vmem:[%s1266 + $0x130] sm:$0xff]
    %v1306 = vld [vmem:[%s1266 + $0x138] sm:$0xff]
    %v1307 = vld [vmem:[%s1266 + $0x140] sm:$0xff]
    %v1308 = vld [vmem:[%s1266 + $0x148] sm:$0xff]
    %v1309 = vld [vmem:[%s1266 + $0x150] sm:$0xff]
    %v1310 = vld [vmem:[%s1266 + $0x158] sm:$0xff]
    %v1311 = vld [vmem:[%s1266 + $0x160] sm:$0xff]
    %v1312 = vld [vmem:[%s1266 + $0x168] sm:$0xff]
    %v1313 = vld [vmem:[%s1266 + $0x170] sm:$0xff]
    %v1314 = vld [vmem:[%s1266 + $0x178] sm:$0xff]
    %s1315 = scalar_lea.vmem [#allocation10], 6
    %v1316 = vld [vmem:[%s1315] sm:$0x7]
    %v1318 = vlaneseq
    %v1319 = vshrl.u32 %v1318, 7
    %v1320 = vsub.s32 0, %v1319
    %v1321 = vrot.slane %v1316, %v1320
    %v1322 = vlaneseq
    %v1323 = vshrl.u32 %v1322, 7
    %v1324 = vsub.s32 1, %v1323
    %v1325 = vrot.slane %v1316, %v1324
    %v1326 = vlaneseq
    %v1327 = vshrl.u32 %v1326, 7
    %v1328 = vsub.s32 2, %v1327
    %v1329 = vrot.slane %v1316, %v1328
    %1333 = vmatprep.subr.mxu0 %v1313
    %1334 = vmatpush1.msra.mxu0 %v1312
    %1335 = vmatprep.subr.mxu0 %v1310
    %1336 = vmatpush1.msra.mxu0 %v1309
    %1337 = vmatprep.subr.mxu0 %v1307
    %1338 = vmatpush1.msra.mxu0 %v1306
    %1339 = vmatprep.subr.mxu0 %v1304
    %1340 = vmatpush1.msra.mxu0 %v1303
    %1341 = vmatprep.subr.mxu0 %v1301
    %1342 = vmatpush1.msra.mxu0 %v1300
    %1343 = vmatprep.subr.mxu0 %v1298
    %1344 = vmatpush1.msra.mxu0 %v1297
    %1345 = vmatprep.subr.mxu0 %v1295
    %1346 = vmatpush1.msra.mxu0 %v1294
    %1347 = vmatprep.subr.mxu0 %v1292
    %1348 = vmatpush1.msra.mxu0 %v1291
    %1349 = vmatprep.subr.mxu0 %v1289
    %1350 = vmatpush1.msra.mxu0 %v1288
    %1351 = vmatprep.subr.mxu0 %v1286
    %1352 = vmatpush1.msra.mxu0 %v1285
    %1353 = vmatprep.subr.mxu0 %v1283
    %1354 = vmatpush1.msra.mxu0 %v1282
    %1355 = vmatprep.subr.mxu0 %v1280
    %1356 = vmatpush1.msra.mxu0 %v1279
    %1357 = vmatprep.subr.mxu0 %v1277
    %1358 = vmatpush1.msra.mxu0 %v1276
    %1359 = vmatprep.subr.mxu0 %v1274
    %1360 = vmatpush1.msra.mxu0 %v1273
    %1361 = vmatprep.subr.mxu0 %v1271
    %1362 = vmatpush1.msra.mxu0 %v1270
    %1363 = vmatprep.subr.mxu0 %v1268
    %1364 = vmatpush1.msra.mxu0 %v1267
    %1365 = vmatprep.subr.mxu0 0.0
    %1366 = vmatpush2.msra.mxu0 0.0
    %1367 = vmatprep.subr.mxu0 0.0
    %1368 = vmatpush2.msra.mxu0 0.0
    %1369 = vmatprep.subr.mxu0 0.0
    %1370 = vmatpush2.msra.mxu0 0.0
    %1371 = vmatprep.subr.mxu0 0.0
    %1372 = vmatpush2.msra.mxu0 0.0
    %1373 = vmatprep.subr.mxu0 0.0
    %1374 = vmatpush2.msra.mxu0 0.0
    %1375 = vmatprep.subr.mxu0 0.0
    %1376 = vmatpush2.msra.mxu0 0.0
    %1377 = vmatprep.subr.mxu0 0.0
    %1378 = vmatpush2.msra.mxu0 0.0
    %1379 = vmatprep.subr.mxu0 0.0
    %1380 = vmatpush2.msra.mxu0 0.0
    %1381 = vmatprep.subr.mxu0 0.0
    %1382 = vmatpush2.msra.mxu0 0.0
    %1383 = vmatprep.subr.mxu0 0.0
    %1384 = vmatpush2.msra.mxu0 0.0
    %1385 = vmatprep.subr.mxu0 0.0
    %1386 = vmatpush2.msra.mxu0 0.0
    %1387 = vmatprep.subr.mxu0 0.0
    %1388 = vmatpush2.msra.mxu0 0.0
    %1389 = vmatprep.subr.mxu0 0.0
    %1390 = vmatpush2.msra.mxu0 0.0
    %1391 = vmatprep.subr.mxu0 0.0
    %1392 = vmatpush2.msra.mxu0 0.0
    %1393 = vmatprep.subr.mxu0 0.0
    %1394 = vmatpush2.msra.mxu0 0.0
    %1395 = vmatprep.subr.mxu0 0.0
    %1396 = vmatpush2.msra.mxu0 0.0
    %1397 = vmatprep.mubr.f32.mxu0 0.0
    %1398 = vmatmul.mubr.f32.gmra.mxu0 %v1264
    %v1399 = vpop.f32.mrf.mxu0
    %v1400 = vadd.f32 %v1321, %v1399
    %v1401 = vpop.f32.mrf.mxu0
    %v1402 = vadd.f32 %v1325, %v1401
    %1403 = vmatprep.mubr.f32.mxu0 0.0
    %1404 = vmatmul.mubr.f32.gmra.mxu0 %v1265
    %v1405 = vpop.f32.mrf.mxu0
    %v1406 = vadd.f32 %v1321, %v1405
    %v1407 = vpop.f32.mrf.mxu0
    %v1408 = vadd.f32 %v1325, %v1407
    %1409 = vdwg.mxu0
    %1410 = vmatprep.subr.mxu0 0.0
    %1411 = vmatpush1.msra.mxu0 %v1314
    %1412 = vmatprep.subr.mxu0 0.0
    %1413 = vmatpush1.msra.mxu0 %v1311
    %1414 = vmatprep.subr.mxu0 0.0
    %1415 = vmatpush1.msra.mxu0 %v1308
    %1416 = vmatprep.subr.mxu0 0.0
    %1417 = vmatpush1.msra.mxu0 %v1305
    %1418 = vmatprep.subr.mxu0 0.0
    %1419 = vmatpush1.msra.mxu0 %v1302
    %1420 = vmatprep.subr.mxu0 0.0
    %1421 = vmatpush1.msra.mxu0 %v1299
    %1422 = vmatprep.subr.mxu0 0.0
    %1423 = vmatpush1.msra.mxu0 %v1296
    %1424 = vmatprep.subr.mxu0 0.0
    %1425 = vmatpush1.msra.mxu0 %v1293
    %1426 = vmatprep.subr.mxu0 0.0
    %1427 = vmatpush1.msra.mxu0 %v1290
    %1428 = vmatprep.subr.mxu0 0.0
    %1429 = vmatpush1.msra.mxu0 %v1287
    %1430 = vmatprep.subr.mxu0 0.0
    %1431 = vmatpush1.msra.mxu0 %v1284
    %1432 = vmatprep.subr.mxu0 0.0
    %1433 = vmatpush1.msra.mxu0 %v1281
    %1434 = vmatprep.subr.mxu0 0.0
    %1435 = vmatpush1.msra.mxu0 %v1278
    %1436 = vmatprep.subr.mxu0 0.0
    %1437 = vmatpush1.msra.mxu0 %v1275
    %1438 = vmatprep.subr.mxu0 0.0
    %1439 = vmatpush1.msra.mxu0 %v1272
    %1440 = vmatprep.subr.mxu0 0.0
    %1441 = vmatpush1.msra.mxu0 %v1269
    %1442 = vmatprep.subr.mxu0 0.0
    %1443 = vmatpush2.msra.mxu0 0.0
    %1444 = vmatprep.subr.mxu0 0.0
    %1445 = vmatpush2.msra.mxu0 0.0
    %1446 = vmatprep.subr.mxu0 0.0
    %1447 = vmatpush2.msra.mxu0 0.0
    %1448 = vmatprep.subr.mxu0 0.0
    %1449 = vmatpush2.msra.mxu0 0.0
    %1450 = vmatprep.subr.mxu0 0.0
    %1451 = vmatpush2.msra.mxu0 0.0
    %1452 = vmatprep.subr.mxu0 0.0
    %1453 = vmatpush2.msra.mxu0 0.0
    %1454 = vmatprep.subr.mxu0 0.0
    %1455 = vmatpush2.msra.mxu0 0.0
    %1456 = vmatprep.subr.mxu0 0.0
    %1457 = vmatpush2.msra.mxu0 0.0
    %1458 = vmatprep.subr.mxu0 0.0
    %1459 = vmatpush2.msra.mxu0 0.0
    %1460 = vmatprep.subr.mxu0 0.0
    %1461 = vmatpush2.msra.mxu0 0.0
    %1462 = vmatprep.subr.mxu0 0.0
    %1463 = vmatpush2.msra.mxu0 0.0
    %1464 = vmatprep.subr.mxu0 0.0
    %1465 = vmatpush2.msra.mxu0 0.0
    %1466 = vmatprep.subr.mxu0 0.0
    %1467 = vmatpush2.msra.mxu0 0.0
    %1468 = vmatprep.subr.mxu0 0.0
    %1469 = vmatpush2.msra.mxu0 0.0
    %1470 = vmatprep.subr.mxu0 0.0
    %1471 = vmatpush2.msra.mxu0 0.0
    %1472 = vmatprep.subr.mxu0 0.0
    %1473 = vmatpush2.msra.mxu0 0.0
    %1474 = vmatprep.mubr.f32.mxu0 0.0
    %1475 = vmatmul.mubr.f32.gmra.mxu0 %v1264
    %v1476 = vpop.f32.mrf.mxu0
    %v1477 = vadd.f32 %v1329, %v1476
    %v1478 = vpop.f32.mrf.mxu0
    %1479 = vmatprep.mubr.f32.mxu0 0.0
    %1480 = vmatmul.mubr.f32.gmra.mxu0 %v1265
    %v1481 = vpop.f32.mrf.mxu0
    %v1482 = vadd.f32 %v1329, %v1481
    %v1483 = vpop.f32.mrf.mxu0
    %1484 = vdwg.mxu0
    %v1485 = vmul.f32 %v1400, 0.33333334
    %v1486 = vmul.f32 %v1406, 0.33333334
    %1487 = vmatprep.subr.mxu0 0.0
    %1488 = vmatpush1.xpose.msra.mxu0 0.0
    %1489 = vmatprep.subr.mxu0 0.0
    %1490 = vmatpush1.xpose.msra.mxu0 0.0
    %1491 = vmatprep.subr.mxu0 0.0
    %1492 = vmatpush1.xpose.msra.mxu0 0.0
    %1493 = vmatprep.subr.mxu0 0.0
    %1494 = vmatpush1.xpose.msra.mxu0 0.0
    %1495 = vmatprep.subr.mxu0 0.0
    %1496 = vmatpush1.xpose.msra.mxu0 0.0
    %1497 = vmatprep.subr.mxu0 0.0
    %1498 = vmatpush1.xpose.msra.mxu0 0.0
    %1499 = vmatprep.subr.mxu0 0.0
    %1500 = vmatpush1.xpose.msra.mxu0 0.0
    %1501 = vmatprep.subr.mxu0 0.0
    %1502 = vmatpush1.xpose.msra.mxu0 0.0
    %1503 = vmatprep.subr.mxu0 0.0
    %1504 = vmatpush1.xpose.msra.mxu0 0.0
    %1505 = vmatprep.subr.mxu0 0.0
    %1506 = vmatpush1.xpose.msra.mxu0 0.0
    %1507 = vmatprep.subr.mxu0 0.0
    %1508 = vmatpush1.xpose.msra.mxu0 0.0
    %1509 = vmatprep.subr.mxu0 0.0
    %1510 = vmatpush1.xpose.msra.mxu0 0.0
    %1511 = vmatprep.subr.mxu0 0.0
    %1512 = vmatpush1.xpose.msra.mxu0 0.0
    %1513 = vmatprep.subr.mxu0 0.0
    %1514 = vmatpush1.xpose.msra.mxu0 0.0
    %1515 = vmatprep.subr.mxu0 0.0
    %1516 = vmatpush1.xpose.msra.mxu0 0.0
    %1517 = vmatprep.subr.mxu0 0.0
    %1518 = vmatpush1.xpose.msra.mxu0 %v1402
    %1519 = vmatprep.subr.mxu0 0.0
    %1520 = vmatpush2.xpose.msra.mxu0 0.0
    %1521 = vmatprep.subr.mxu0 0.0
    %1522 = vmatpush2.xpose.msra.mxu0 0.0
    %1523 = vmatprep.subr.mxu0 0.0
    %1524 = vmatpush2.xpose.msra.mxu0 0.0
    %1525 = vmatprep.subr.mxu0 0.0
    %1526 = vmatpush2.xpose.msra.mxu0 0.0
    %1527 = vmatprep.subr.mxu0 0.0
    %1528 = vmatpush2.xpose.msra.mxu0 0.0
    %1529 = vmatprep.subr.mxu0 0.0
    %1530 = vmatpush2.xpose.msra.mxu0 0.0
    %1531 = vmatprep.subr.mxu0 0.0
    %1532 = vmatpush2.xpose.msra.mxu0 0.0
    %1533 = vmatprep.subr.mxu0 0.0
    %1534 = vmatpush2.xpose.msra.mxu0 0.0
    %1535 = vmatprep.subr.mxu0 0.0
    %1536 = vmatpush2.xpose.msra.mxu0 0.0
    %1537 = vmatprep.subr.mxu0 0.0
    %1538 = vmatpush2.xpose.msra.mxu0 0.0
    %1539 = vmatprep.subr.mxu0 0.0
    %1540 = vmatpush2.xpose.msra.mxu0 0.0
    %1541 = vmatprep.subr.mxu0 0.0
    %1542 = vmatpush2.xpose.msra.mxu0 0.0
    %1543 = vmatprep.subr.mxu0 0.0
    %1544 = vmatpush2.xpose.msra.mxu0 0.0
    %1545 = vmatprep.subr.mxu0 0.0
    %1546 = vmatpush2.xpose.msra.mxu0 0.0
    %1547 = vmatprep.subr.mxu0 0.0
    %1548 = vmatpush2.xpose.msra.mxu0 0.0
    %1549 = vmatprep.subr.mxu0 0.0
    %1550 = vmatpush2.xpose.msra.mxu0 0.0
    %1551 = vmatprep.mubr.f32.mxu0 0.0
    %1552 = vmatmul.mubr.f32.gmra.mxu0 %v1485
    %v1553 = vpop.f32.mrf.mxu0
    %v1554 = vadd.f32 0.0, %v1553
    %v1555 = vpop.f32.mrf.mxu0
    %1556 = vdwg.mxu0
    %1557 = vmatprep.subr.mxu0 0.0
    %1558 = vmatpush1.xpose.msra.mxu0 0.0
    %1559 = vmatprep.subr.mxu0 0.0
    %1560 = vmatpush1.xpose.msra.mxu0 0.0
    %1561 = vmatprep.subr.mxu0 0.0
    %1562 = vmatpush1.xpose.msra.mxu0 0.0
    %1563 = vmatprep.subr.mxu0 0.0
    %1564 = vmatpush1.xpose.msra.mxu0 0.0
    %1565 = vmatprep.subr.mxu0 0.0
    %1566 = vmatpush1.xpose.msra.mxu0 0.0
    %1567 = vmatprep.subr.mxu0 0.0
    %1568 = vmatpush1.xpose.msra.mxu0 0.0
    %1569 = vmatprep.subr.mxu0 0.0
    %1570 = vmatpush1.xpose.msra.mxu0 0.0
    %1571 = vmatprep.subr.mxu0 0.0
    %1572 = vmatpush1.xpose.msra.mxu0 0.0
    %1573 = vmatprep.subr.mxu0 0.0
    %1574 = vmatpush1.xpose.msra.mxu0 0.0
    %1575 = vmatprep.subr.mxu0 0.0
    %1576 = vmatpush1.xpose.msra.mxu0 0.0
    %1577 = vmatprep.subr.mxu0 0.0
    %1578 = vmatpush1.xpose.msra.mxu0 0.0
    %1579 = vmatprep.subr.mxu0 0.0
    %1580 = vmatpush1.xpose.msra.mxu0 0.0
    %1581 = vmatprep.subr.mxu0 0.0
    %1582 = vmatpush1.xpose.msra.mxu0 0.0
    %1583 = vmatprep.subr.mxu0 0.0
    %1584 = vmatpush1.xpose.msra.mxu0 0.0
    %1585 = vmatprep.subr.mxu0 0.0
    %1586 = vmatpush1.xpose.msra.mxu0 0.0
    %1587 = vmatprep.subr.mxu0 0.0
    %1588 = vmatpush1.xpose.msra.mxu0 %v1408
    %1589 = vmatprep.subr.mxu0 0.0
    %1590 = vmatpush2.xpose.msra.mxu0 0.0
    %1591 = vmatprep.subr.mxu0 0.0
    %1592 = vmatpush2.xpose.msra.mxu0 0.0
    %1593 = vmatprep.subr.mxu0 0.0
    %1594 = vmatpush2.xpose.msra.mxu0 0.0
    %1595 = vmatprep.subr.mxu0 0.0
    %1596 = vmatpush2.xpose.msra.mxu0 0.0
    %1597 = vmatprep.subr.mxu0 0.0
    %1598 = vmatpush2.xpose.msra.mxu0 0.0
    %1599 = vmatprep.subr.mxu0 0.0
    %1600 = vmatpush2.xpose.msra.mxu0 0.0
    %1601 = vmatprep.subr.mxu0 0.0
    %1602 = vmatpush2.xpose.msra.mxu0 0.0
    %1603 = vmatprep.subr.mxu0 0.0
    %1604 = vmatpush2.xpose.msra.mxu0 0.0
    %1605 = vmatprep.subr.mxu0 0.0
    %1606 = vmatpush2.xpose.msra.mxu0 0.0
    %1607 = vmatprep.subr.mxu0 0.0
    %1608 = vmatpush2.xpose.msra.mxu0 0.0
    %1609 = vmatprep.subr.mxu0 0.0
    %1610 = vmatpush2.xpose.msra.mxu0 0.0
    %1611 = vmatprep.subr.mxu0 0.0
    %1612 = vmatpush2.xpose.msra.mxu0 0.0
    %1613 = vmatprep.subr.mxu0 0.0
    %1614 = vmatpush2.xpose.msra.mxu0 0.0
    %1615 = vmatprep.subr.mxu0 0.0
    %1616 = vmatpush2.xpose.msra.mxu0 0.0
    %1617 = vmatprep.subr.mxu0 0.0
    %1618 = vmatpush2.xpose.msra.mxu0 0.0
    %1619 = vmatprep.subr.mxu0 0.0
    %1620 = vmatpush2.xpose.msra.mxu0 0.0
    %1621 = vmatprep.mubr.f32.mxu0 0.0
    %1622 = vmatmul.mubr.f32.gmra.mxu0 %v1486
    %v1623 = vpop.f32.mrf.mxu0
    %v1624 = vadd.f32 0.0, %v1623
    %v1625 = vpop.f32.mrf.mxu0
    %1626 = vdwg.mxu0
    %v1627 = vsel %vm128, %v1554, -inf
    %1628 = vmax.xlane.f32.xlu0 %v1627
    %v1629 = vpop.xlane.xlu0 %1628
    %v1630 = vsel %vm128, %v1624, -inf
    %1631 = vmax.xlane.f32.xlu0 %v1630
    %v1632 = vpop.xlane.xlu0 %1631
    %v1633 = vsub.f32 %v1554, %v1629
    %v1634 = vsub.f32 %v1624, %v1632
    %v1635 = vmul.f32 %v1633, 1.442695
    %v1636 = vpow.pop %v1635
    %v1637 = vmul.f32 %v1634, 1.442695
    %v1638 = vpow.pop %v1637
    %v1639 = vsel %vm128, %v1636, 0.0
    %1640 = vadd.xlane.f32.xlu0 %v1639
    %v1641 = vpop.xlane.xlu0 %1640
    %v1642 = vsel %vm128, %v1638, 0.0
    %1643 = vadd.xlane.f32.xlu0 %v1642
    %v1644 = vpop.xlane.xlu0 %1643
    %v1646 = vsel %vm128, %v1636, 0
    %1648 = vmatprep.subr.mxu0 0.0
    %1649 = vmatpush1.msra.mxu0 0.0
    %1650 = vmatprep.subr.mxu0 0.0
    %1651 = vmatpush1.msra.mxu0 0.0
    %1652 = vmatprep.subr.mxu0 0.0
    %1653 = vmatpush1.msra.mxu0 0.0
    %1654 = vmatprep.subr.mxu0 0.0
    %1655 = vmatpush1.msra.mxu0 0.0
    %1656 = vmatprep.subr.mxu0 0.0
    %1657 = vmatpush1.msra.mxu0 0.0
    %1658 = vmatprep.subr.mxu0 0.0
    %1659 = vmatpush1.msra.mxu0 0.0
    %1660 = vmatprep.subr.mxu0 0.0
    %1661 = vmatpush1.msra.mxu0 0.0
    %1662 = vmatprep.subr.mxu0 0.0
    %1663 = vmatpush1.msra.mxu0 0.0
    %1664 = vmatprep.subr.mxu0 0.0
    %1665 = vmatpush1.msra.mxu0 0.0
    %1666 = vmatprep.subr.mxu0 0.0
    %1667 = vmatpush1.msra.mxu0 0.0
    %1668 = vmatprep.subr.mxu0 0.0
    %1669 = vmatpush1.msra.mxu0 0.0
    %1670 = vmatprep.subr.mxu0 0.0
    %1671 = vmatpush1.msra.mxu0 0.0
    %1672 = vmatprep.subr.mxu0 0.0
    %1673 = vmatpush1.msra.mxu0 0.0
    %1674 = vmatprep.subr.mxu0 0.0
    %1675 = vmatpush1.msra.mxu0 0.0
    %1676 = vmatprep.subr.mxu0 0.0
    %1677 = vmatpush1.msra.mxu0 0.0
    %1678 = vmatprep.subr.mxu0 0.0
    %1679 = vmatpush1.msra.mxu0 %v1477
    %1680 = vmatprep.subr.mxu0 0.0
    %1681 = vmatpush2.msra.mxu0 0.0
    %1682 = vmatprep.subr.mxu0 0.0
    %1683 = vmatpush2.msra.mxu0 0.0
    %1684 = vmatprep.subr.mxu0 0.0
    %1685 = vmatpush2.msra.mxu0 0.0
    %1686 = vmatprep.subr.mxu0 0.0
    %1687 = vmatpush2.msra.mxu0 0.0
    %1688 = vmatprep.subr.mxu0 0.0
    %1689 = vmatpush2.msra.mxu0 0.0
    %1690 = vmatprep.subr.mxu0 0.0
    %1691 = vmatpush2.msra.mxu0 0.0
    %1692 = vmatprep.subr.mxu0 0.0
    %1693 = vmatpush2.msra.mxu0 0.0
    %1694 = vmatprep.subr.mxu0 0.0
    %1695 = vmatpush2.msra.mxu0 0.0
    %1696 = vmatprep.subr.mxu0 0.0
    %1697 = vmatpush2.msra.mxu0 0.0
    %1698 = vmatprep.subr.mxu0 0.0
    %1699 = vmatpush2.msra.mxu0 0.0
    %1700 = vmatprep.subr.mxu0 0.0
    %1701 = vmatpush2.msra.mxu0 0.0
    %1702 = vmatprep.subr.mxu0 0.0
    %1703 = vmatpush2.msra.mxu0 0.0
    %1704 = vmatprep.subr.mxu0 0.0
    %1705 = vmatpush2.msra.mxu0 0.0
    %1706 = vmatprep.subr.mxu0 0.0
    %1707 = vmatpush2.msra.mxu0 0.0
    %1708 = vmatprep.subr.mxu0 0.0
    %1709 = vmatpush2.msra.mxu0 0.0
    %1710 = vmatprep.subr.mxu0 0.0
    %1711 = vmatpush2.msra.mxu0 0.0
    %1712 = vmatprep.mubr.f32.mxu0 0.0
    %1713 = vmatmul.mubr.f32.gmra.mxu0 %v1646
    %v1714 = vpop.f32.mrf.mxu0
    %v1715 = vadd.f32 0.0, %v1714
    %v1716 = vpop.f32.mrf.mxu0
    %1717 = vdwg.mxu0
    %v1719 = vsel %vm128, %v1638, 0
    %1721 = vmatprep.subr.mxu0 0.0
    %1722 = vmatpush1.msra.mxu0 0.0
    %1723 = vmatprep.subr.mxu0 0.0
    %1724 = vmatpush1.msra.mxu0 0.0
    %1725 = vmatprep.subr.mxu0 0.0
    %1726 = vmatpush1.msra.mxu0 0.0
    %1727 = vmatprep.subr.mxu0 0.0
    %1728 = vmatpush1.msra.mxu0 0.0
    %1729 = vmatprep.subr.mxu0 0.0
    %1730 = vmatpush1.msra.mxu0 0.0
    %1731 = vmatprep.subr.mxu0 0.0
    %1732 = vmatpush1.msra.mxu0 0.0
    %1733 = vmatprep.subr.mxu0 0.0
    %1734 = vmatpush1.msra.mxu0 0.0
    %1735 = vmatprep.subr.mxu0 0.0
    %1736 = vmatpush1.msra.mxu0 0.0
    %1737 = vmatprep.subr.mxu0 0.0
    %1738 = vmatpush1.msra.mxu0 0.0
    %1739 = vmatprep.subr.mxu0 0.0
    %1740 = vmatpush1.msra.mxu0 0.0
    %1741 = vmatprep.subr.mxu0 0.0
    %1742 = vmatpush1.msra.mxu0 0.0
    %1743 = vmatprep.subr.mxu0 0.0
    %1744 = vmatpush1.msra.mxu0 0.0
    %1745 = vmatprep.subr.mxu0 0.0
    %1746 = vmatpush1.msra.mxu0 0.0
    %1747 = vmatprep.subr.mxu0 0.0
    %1748 = vmatpush1.msra.mxu0 0.0
    %1749 = vmatprep.subr.mxu0 0.0
    %1750 = vmatpush1.msra.mxu0 0.0
    %1751 = vmatprep.subr.mxu0 0.0
    %1752 = vmatpush1.msra.mxu0 %v1482
    %1753 = vmatprep.subr.mxu0 0.0
    %1754 = vmatpush2.msra.mxu0 0.0
    %1755 = vmatprep.subr.mxu0 0.0
    %1756 = vmatpush2.msra.mxu0 0.0
    %1757 = vmatprep.subr.mxu0 0.0
    %1758 = vmatpush2.msra.mxu0 0.0
    %1759 = vmatprep.subr.mxu0 0.0
    %1760 = vmatpush2.msra.mxu0 0.0
    %1761 = vmatprep.subr.mxu0 0.0
    %1762 = vmatpush2.msra.mxu0 0.0
    %1763 = vmatprep.subr.mxu0 0.0
    %1764 = vmatpush2.msra.mxu0 0.0
    %1765 = vmatprep.subr.mxu0 0.0
    %1766 = vmatpush2.msra.mxu0 0.0
    %1767 = vmatprep.subr.mxu0 0.0
    %1768 = vmatpush2.msra.mxu0 0.0
    %1769 = vmatprep.subr.mxu0 0.0
    %1770 = vmatpush2.msra.mxu0 0.0
    %1771 = vmatprep.subr.mxu0 0.0
    %1772 = vmatpush2.msra.mxu0 0.0
    %1773 = vmatprep.subr.mxu0 0.0
    %1774 = vmatpush2.msra.mxu0 0.0
    %1775 = vmatprep.subr.mxu0 0.0
    %1776 = vmatpush2.msra.mxu0 0.0
    %1777 = vmatprep.subr.mxu0 0.0
    %1778 = vmatpush2.msra.mxu0 0.0
    %1779 = vmatprep.subr.mxu0 0.0
    %1780 = vmatpush2.msra.mxu0 0.0
    %1781 = vmatprep.subr.mxu0 0.0
    %1782 = vmatpush2.msra.mxu0 0.0
    %1783 = vmatprep.subr.mxu0 0.0
    %1784 = vmatpush2.msra.mxu0 0.0
    %1785 = vmatprep.mubr.f32.mxu0 0.0
    %1786 = vmatmul.mubr.f32.gmra.mxu0 %v1719
    %v1787 = vpop.f32.mrf.mxu0
    %v1788 = vadd.f32 0.0, %v1787
    %v1789 = vpop.f32.mrf.mxu0
    %1790 = vdwg.mxu0
    %v1791 = vrcp.pop %v1641
    %v1792 = vrcp.pop %v1644
    %v1793 = vmul.f32 %v1715, %v1791
    %v1794 = vmul.f32 %v1788, %v1792
    %s1795 = scalar_lea.vmem [#allocation8], 1152
    %v1796 = vld [vmem:[%s1795] sm:$0xff]
    %v1797 = vld [vmem:[%s1795 + $0x8] sm:$0xff]
    %v1798 = vld [vmem:[%s1795 + $0x10] sm:$0xff]
    %v1799 = vld [vmem:[%s1795 + $0x18] sm:$0xff]
    %v1800 = vld [vmem:[%s1795 + $0x20] sm:$0xff]
    %v1801 = vld [vmem:[%s1795 + $0x28] sm:$0xff]
    %v1802 = vld [vmem:[%s1795 + $0x30] sm:$0xff]
    %v1803 = vld [vmem:[%s1795 + $0x38] sm:$0xff]
    %v1804 = vld [vmem:[%s1795 + $0x40] sm:$0xff]
    %v1805 = vld [vmem:[%s1795 + $0x48] sm:$0xff]
    %v1806 = vld [vmem:[%s1795 + $0x50] sm:$0xff]
    %v1807 = vld [vmem:[%s1795 + $0x58] sm:$0xff]
    %v1808 = vld [vmem:[%s1795 + $0x60] sm:$0xff]
    %v1809 = vld [vmem:[%s1795 + $0x68] sm:$0xff]
    %v1810 = vld [vmem:[%s1795 + $0x70] sm:$0xff]
    %v1811 = vld [vmem:[%s1795 + $0x78] sm:$0xff]
    %v1812 = vld [vmem:[%s1795 + $0x80] sm:$0xff]
    %v1813 = vld [vmem:[%s1795 + $0x88] sm:$0xff]
    %v1814 = vld [vmem:[%s1795 + $0x90] sm:$0xff]
    %v1815 = vld [vmem:[%s1795 + $0x98] sm:$0xff]
    %v1816 = vld [vmem:[%s1795 + $0xa0] sm:$0xff]
    %v1817 = vld [vmem:[%s1795 + $0xa8] sm:$0xff]
    %v1818 = vld [vmem:[%s1795 + $0xb0] sm:$0xff]
    %v1819 = vld [vmem:[%s1795 + $0xb8] sm:$0xff]
    %v1820 = vld [vmem:[%s1795 + $0xc0] sm:$0xff]
    %v1821 = vld [vmem:[%s1795 + $0xc8] sm:$0xff]
    %v1822 = vld [vmem:[%s1795 + $0xd0] sm:$0xff]
    %v1823 = vld [vmem:[%s1795 + $0xd8] sm:$0xff]
    %v1824 = vld [vmem:[%s1795 + $0xe0] sm:$0xff]
    %v1825 = vld [vmem:[%s1795 + $0xe8] sm:$0xff]
    %v1826 = vld [vmem:[%s1795 + $0xf0] sm:$0xff]
    %v1827 = vld [vmem:[%s1795 + $0xf8] sm:$0xff]
    %v1828 = vld [vmem:[%s1795 + $0x100] sm:$0xff]
    %v1829 = vld [vmem:[%s1795 + $0x108] sm:$0xff]
    %v1830 = vld [vmem:[%s1795 + $0x110] sm:$0xff]
    %v1831 = vld [vmem:[%s1795 + $0x118] sm:$0xff]
    %v1832 = vld [vmem:[%s1795 + $0x120] sm:$0xff]
    %v1833 = vld [vmem:[%s1795 + $0x128] sm:$0xff]
    %v1834 = vld [vmem:[%s1795 + $0x130] sm:$0xff]
    %v1835 = vld [vmem:[%s1795 + $0x138] sm:$0xff]
    %v1836 = vld [vmem:[%s1795 + $0x140] sm:$0xff]
    %v1837 = vld [vmem:[%s1795 + $0x148] sm:$0xff]
    %v1838 = vld [vmem:[%s1795 + $0x150] sm:$0xff]
    %v1839 = vld [vmem:[%s1795 + $0x158] sm:$0xff]
    %v1840 = vld [vmem:[%s1795 + $0x160] sm:$0xff]
    %v1841 = vld [vmem:[%s1795 + $0x168] sm:$0xff]
    %v1842 = vld [vmem:[%s1795 + $0x170] sm:$0xff]
    %v1843 = vld [vmem:[%s1795 + $0x178] sm:$0xff]
    %s1844 = scalar_lea.vmem [#allocation10], 9
    %v1845 = vld [vmem:[%s1844] sm:$0x7]
    %v1847 = vlaneseq
    %v1848 = vshrl.u32 %v1847, 7
    %v1849 = vsub.s32 0, %v1848
    %v1850 = vrot.slane %v1845, %v1849
    %v1851 = vlaneseq
    %v1852 = vshrl.u32 %v1851, 7
    %v1853 = vsub.s32 1, %v1852
    %v1854 = vrot.slane %v1845, %v1853
    %v1855 = vlaneseq
    %v1856 = vshrl.u32 %v1855, 7
    %v1857 = vsub.s32 2, %v1856
    %v1858 = vrot.slane %v1845, %v1857
    %1862 = vmatprep.subr.mxu0 %v1842
    %1863 = vmatpush1.msra.mxu0 %v1841
    %1864 = vmatprep.subr.mxu0 %v1839
    %1865 = vmatpush1.msra.mxu0 %v1838
    %1866 = vmatprep.subr.mxu0 %v1836
    %1867 = vmatpush1.msra.mxu0 %v1835
    %1868 = vmatprep.subr.mxu0 %v1833
    %1869 = vmatpush1.msra.mxu0 %v1832
    %1870 = vmatprep.subr.mxu0 %v1830
    %1871 = vmatpush1.msra.mxu0 %v1829
    %1872 = vmatprep.subr.mxu0 %v1827
    %1873 = vmatpush1.msra.mxu0 %v1826
    %1874 = vmatprep.subr.mxu0 %v1824
    %1875 = vmatpush1.msra.mxu0 %v1823
    %1876 = vmatprep.subr.mxu0 %v1821
    %1877 = vmatpush1.msra.mxu0 %v1820
    %1878 = vmatprep.subr.mxu0 %v1818
    %1879 = vmatpush1.msra.mxu0 %v1817
    %1880 = vmatprep.subr.mxu0 %v1815
    %1881 = vmatpush1.msra.mxu0 %v1814
    %1882 = vmatprep.subr.mxu0 %v1812
    %1883 = vmatpush1.msra.mxu0 %v1811
    %1884 = vmatprep.subr.mxu0 %v1809
    %1885 = vmatpush1.msra.mxu0 %v1808
    %1886 = vmatprep.subr.mxu0 %v1806
    %1887 = vmatpush1.msra.mxu0 %v1805
    %1888 = vmatprep.subr.mxu0 %v1803
    %1889 = vmatpush1.msra.mxu0 %v1802
    %1890 = vmatprep.subr.mxu0 %v1800
    %1891 = vmatpush1.msra.mxu0 %v1799
    %1892 = vmatprep.subr.mxu0 %v1797
    %1893 = vmatpush1.msra.mxu0 %v1796
    %1894 = vmatprep.subr.mxu0 0.0
    %1895 = vmatpush2.msra.mxu0 0.0
    %1896 = vmatprep.subr.mxu0 0.0
    %1897 = vmatpush2.msra.mxu0 0.0
    %1898 = vmatprep.subr.mxu0 0.0
    %1899 = vmatpush2.msra.mxu0 0.0
    %1900 = vmatprep.subr.mxu0 0.0
    %1901 = vmatpush2.msra.mxu0 0.0
    %1902 = vmatprep.subr.mxu0 0.0
    %1903 = vmatpush2.msra.mxu0 0.0
    %1904 = vmatprep.subr.mxu0 0.0
    %1905 = vmatpush2.msra.mxu0 0.0
    %1906 = vmatprep.subr.mxu0 0.0
    %1907 = vmatpush2.msra.mxu0 0.0
    %1908 = vmatprep.subr.mxu0 0.0
    %1909 = vmatpush2.msra.mxu0 0.0
    %1910 = vmatprep.subr.mxu0 0.0
    %1911 = vmatpush2.msra.mxu0 0.0
    %1912 = vmatprep.subr.mxu0 0.0
    %1913 = vmatpush2.msra.mxu0 0.0
    %1914 = vmatprep.subr.mxu0 0.0
    %1915 = vmatpush2.msra.mxu0 0.0
    %1916 = vmatprep.subr.mxu0 0.0
    %1917 = vmatpush2.msra.mxu0 0.0
    %1918 = vmatprep.subr.mxu0 0.0
    %1919 = vmatpush2.msra.mxu0 0.0
    %1920 = vmatprep.subr.mxu0 0.0
    %1921 = vmatpush2.msra.mxu0 0.0
    %1922 = vmatprep.subr.mxu0 0.0
    %1923 = vmatpush2.msra.mxu0 0.0
    %1924 = vmatprep.subr.mxu0 0.0
    %1925 = vmatpush2.msra.mxu0 0.0
    %1926 = vmatprep.mubr.f32.mxu0 0.0
    %1927 = vmatmul.mubr.f32.gmra.mxu0 %v1793
    %v1928 = vpop.f32.mrf.mxu0
    %v1929 = vadd.f32 %v1850, %v1928
    %v1930 = vpop.f32.mrf.mxu0
    %v1931 = vadd.f32 %v1854, %v1930
    %1932 = vmatprep.mubr.f32.mxu0 0.0
    %1933 = vmatmul.mubr.f32.gmra.mxu0 %v1794
    %v1934 = vpop.f32.mrf.mxu0
    %v1935 = vadd.f32 %v1850, %v1934
    %v1936 = vpop.f32.mrf.mxu0
    %v1937 = vadd.f32 %v1854, %v1936
    %1938 = vdwg.mxu0
    %1939 = vmatprep.subr.mxu0 0.0
    %1940 = vmatpush1.msra.mxu0 %v1843
    %1941 = vmatprep.subr.mxu0 0.0
    %1942 = vmatpush1.msra.mxu0 %v1840
    %1943 = vmatprep.subr.mxu0 0.0
    %1944 = vmatpush1.msra.mxu0 %v1837
    %1945 = vmatprep.subr.mxu0 0.0
    %1946 = vmatpush1.msra.mxu0 %v1834
    %1947 = vmatprep.subr.mxu0 0.0
    %1948 = vmatpush1.msra.mxu0 %v1831
    %1949 = vmatprep.subr.mxu0 0.0
    %1950 = vmatpush1.msra.mxu0 %v1828
    %1951 = vmatprep.subr.mxu0 0.0
    %1952 = vmatpush1.msra.mxu0 %v1825
    %1953 = vmatprep.subr.mxu0 0.0
    %1954 = vmatpush1.msra.mxu0 %v1822
    %1955 = vmatprep.subr.mxu0 0.0
    %1956 = vmatpush1.msra.mxu0 %v1819
    %1957 = vmatprep.subr.mxu0 0.0
    %1958 = vmatpush1.msra.mxu0 %v1816
    %1959 = vmatprep.subr.mxu0 0.0
    %1960 = vmatpush1.msra.mxu0 %v1813
    %1961 = vmatprep.subr.mxu0 0.0
    %1962 = vmatpush1.msra.mxu0 %v1810
    %1963 = vmatprep.subr.mxu0 0.0
    %1964 = vmatpush1.msra.mxu0 %v1807
    %1965 = vmatprep.subr.mxu0 0.0
    %1966 = vmatpush1.msra.mxu0 %v1804
    %1967 = vmatprep.subr.mxu0 0.0
    %1968 = vmatpush1.msra.mxu0 %v1801
    %1969 = vmatprep.subr.mxu0 0.0
    %1970 = vmatpush1.msra.mxu0 %v1798
    %1971 = vmatprep.subr.mxu0 0.0
    %1972 = vmatpush2.msra.mxu0 0.0
    %1973 = vmatprep.subr.mxu0 0.0
    %1974 = vmatpush2.msra.mxu0 0.0
    %1975 = vmatprep.subr.mxu0 0.0
    %1976 = vmatpush2.msra.mxu0 0.0
    %1977 = vmatprep.subr.mxu0 0.0
    %1978 = vmatpush2.msra.mxu0 0.0
    %1979 = vmatprep.subr.mxu0 0.0
    %1980 = vmatpush2.msra.mxu0 0.0
    %1981 = vmatprep.subr.mxu0 0.0
    %1982 = vmatpush2.msra.mxu0 0.0
    %1983 = vmatprep.subr.mxu0 0.0
    %1984 = vmatpush2.msra.mxu0 0.0
    %1985 = vmatprep.subr.mxu0 0.0
    %1986 = vmatpush2.msra.mxu0 0.0
    %1987 = vmatprep.subr.mxu0 0.0
    %1988 = vmatpush2.msra.mxu0 0.0
    %1989 = vmatprep.subr.mxu0 0.0
    %1990 = vmatpush2.msra.mxu0 0.0
    %1991 = vmatprep.subr.mxu0 0.0
    %1992 = vmatpush2.msra.mxu0 0.0
    %1993 = vmatprep.subr.mxu0 0.0
    %1994 = vmatpush2.msra.mxu0 0.0
    %1995 = vmatprep.subr.mxu0 0.0
    %1996 = vmatpush2.msra.mxu0 0.0
    %1997 = vmatprep.subr.mxu0 0.0
    %1998 = vmatpush2.msra.mxu0 0.0
    %1999 = vmatprep.subr.mxu0 0.0
    %2000 = vmatpush2.msra.mxu0 0.0
    %2001 = vmatprep.subr.mxu0 0.0
    %2002 = vmatpush2.msra.mxu0 0.0
    %2003 = vmatprep.mubr.f32.mxu0 0.0
    %2004 = vmatmul.mubr.f32.gmra.mxu0 %v1793
    %v2005 = vpop.f32.mrf.mxu0
    %v2006 = vadd.f32 %v1858, %v2005
    %v2007 = vpop.f32.mrf.mxu0
    %2008 = vmatprep.mubr.f32.mxu0 0.0
    %2009 = vmatmul.mubr.f32.gmra.mxu0 %v1794
    %v2010 = vpop.f32.mrf.mxu0
    %v2011 = vadd.f32 %v1858, %v2010
    %v2012 = vpop.f32.mrf.mxu0
    %2013 = vdwg.mxu0
    %v2014 = vmul.f32 %v1929, 0.33333334
    %v2015 = vmul.f32 %v1935, 0.33333334
    %2016 = vmatprep.subr.mxu0 0.0
    %2017 = vmatpush1.xpose.msra.mxu0 0.0
    %2018 = vmatprep.subr.mxu0 0.0
    %2019 = vmatpush1.xpose.msra.mxu0 0.0
    %2020 = vmatprep.subr.mxu0 0.0
    %2021 = vmatpush1.xpose.msra.mxu0 0.0
    %2022 = vmatprep.subr.mxu0 0.0
    %2023 = vmatpush1.xpose.msra.mxu0 0.0
    %2024 = vmatprep.subr.mxu0 0.0
    %2025 = vmatpush1.xpose.msra.mxu0 0.0
    %2026 = vmatprep.subr.mxu0 0.0
    %2027 = vmatpush1.xpose.msra.mxu0 0.0
    %2028 = vmatprep.subr.mxu0 0.0
    %2029 = vmatpush1.xpose.msra.mxu0 0.0
    %2030 = vmatprep.subr.mxu0 0.0
    %2031 = vmatpush1.xpose.msra.mxu0 0.0
    %2032 = vmatprep.subr.mxu0 0.0
    %2033 = vmatpush1.xpose.msra.mxu0 0.0
    %2034 = vmatprep.subr.mxu0 0.0
    %2035 = vmatpush1.xpose.msra.mxu0 0.0
    %2036 = vmatprep.subr.mxu0 0.0
    %2037 = vmatpush1.xpose.msra.mxu0 0.0
    %2038 = vmatprep.subr.mxu0 0.0
    %2039 = vmatpush1.xpose.msra.mxu0 0.0
    %2040 = vmatprep.subr.mxu0 0.0
    %2041 = vmatpush1.xpose.msra.mxu0 0.0
    %2042 = vmatprep.subr.mxu0 0.0
    %2043 = vmatpush1.xpose.msra.mxu0 0.0
    %2044 = vmatprep.subr.mxu0 0.0
    %2045 = vmatpush1.xpose.msra.mxu0 0.0
    %2046 = vmatprep.subr.mxu0 0.0
    %2047 = vmatpush1.xpose.msra.mxu0 %v1931
    %2048 = vmatprep.subr.mxu0 0.0
    %2049 = vmatpush2.xpose.msra.mxu0 0.0
    %2050 = vmatprep.subr.mxu0 0.0
    %2051 = vmatpush2.xpose.msra.mxu0 0.0
    %2052 = vmatprep.subr.mxu0 0.0
    %2053 = vmatpush2.xpose.msra.mxu0 0.0
    %2054 = vmatprep.subr.mxu0 0.0
    %2055 = vmatpush2.xpose.msra.mxu0 0.0
    %2056 = vmatprep.subr.mxu0 0.0
    %2057 = vmatpush2.xpose.msra.mxu0 0.0
    %2058 = vmatprep.subr.mxu0 0.0
    %2059 = vmatpush2.xpose.msra.mxu0 0.0
    %2060 = vmatprep.subr.mxu0 0.0
    %2061 = vmatpush2.xpose.msra.mxu0 0.0
    %2062 = vmatprep.subr.mxu0 0.0
    %2063 = vmatpush2.xpose.msra.mxu0 0.0
    %2064 = vmatprep.subr.mxu0 0.0
    %2065 = vmatpush2.xpose.msra.mxu0 0.0
    %2066 = vmatprep.subr.mxu0 0.0
    %2067 = vmatpush2.xpose.msra.mxu0 0.0
    %2068 = vmatprep.subr.mxu0 0.0
    %2069 = vmatpush2.xpose.msra.mxu0 0.0
    %2070 = vmatprep.subr.mxu0 0.0
    %2071 = vmatpush2.xpose.msra.mxu0 0.0
    %2072 = vmatprep.subr.mxu0 0.0
    %2073 = vmatpush2.xpose.msra.mxu0 0.0
    %2074 = vmatprep.subr.mxu0 0.0
    %2075 = vmatpush2.xpose.msra.mxu0 0.0
    %2076 = vmatprep.subr.mxu0 0.0
    %2077 = vmatpush2.xpose.msra.mxu0 0.0
    %2078 = vmatprep.subr.mxu0 0.0
    %2079 = vmatpush2.xpose.msra.mxu0 0.0
    %2080 = vmatprep.mubr.f32.mxu0 0.0
    %2081 = vmatmul.mubr.f32.gmra.mxu0 %v2014
    %v2082 = vpop.f32.mrf.mxu0
    %v2083 = vadd.f32 0.0, %v2082
    %v2084 = vpop.f32.mrf.mxu0
    %2085 = vdwg.mxu0
    %2086 = vmatprep.subr.mxu0 0.0
    %2087 = vmatpush1.xpose.msra.mxu0 0.0
    %2088 = vmatprep.subr.mxu0 0.0
    %2089 = vmatpush1.xpose.msra.mxu0 0.0
    %2090 = vmatprep.subr.mxu0 0.0
    %2091 = vmatpush1.xpose.msra.mxu0 0.0
    %2092 = vmatprep.subr.mxu0 0.0
    %2093 = vmatpush1.xpose.msra.mxu0 0.0
    %2094 = vmatprep.subr.mxu0 0.0
    %2095 = vmatpush1.xpose.msra.mxu0 0.0
    %2096 = vmatprep.subr.mxu0 0.0
    %2097 = vmatpush1.xpose.msra.mxu0 0.0
    %2098 = vmatprep.subr.mxu0 0.0
    %2099 = vmatpush1.xpose.msra.mxu0 0.0
    %2100 = vmatprep.subr.mxu0 0.0
    %2101 = vmatpush1.xpose.msra.mxu0 0.0
    %2102 = vmatprep.subr.mxu0 0.0
    %2103 = vmatpush1.xpose.msra.mxu0 0.0
    %2104 = vmatprep.subr.mxu0 0.0
    %2105 = vmatpush1.xpose.msra.mxu0 0.0
    %2106 = vmatprep.subr.mxu0 0.0
    %2107 = vmatpush1.xpose.msra.mxu0 0.0
    %2108 = vmatprep.subr.mxu0 0.0
    %2109 = vmatpush1.xpose.msra.mxu0 0.0
    %2110 = vmatprep.subr.mxu0 0.0
    %2111 = vmatpush1.xpose.msra.mxu0 0.0
    %2112 = vmatprep.subr.mxu0 0.0
    %2113 = vmatpush1.xpose.msra.mxu0 0.0
    %2114 = vmatprep.subr.mxu0 0.0
    %2115 = vmatpush1.xpose.msra.mxu0 0.0
    %2116 = vmatprep.subr.mxu0 0.0
    %2117 = vmatpush1.xpose.msra.mxu0 %v1937
    %2118 = vmatprep.subr.mxu0 0.0
    %2119 = vmatpush2.xpose.msra.mxu0 0.0
    %2120 = vmatprep.subr.mxu0 0.0
    %2121 = vmatpush2.xpose.msra.mxu0 0.0
    %2122 = vmatprep.subr.mxu0 0.0
    %2123 = vmatpush2.xpose.msra.mxu0 0.0
    %2124 = vmatprep.subr.mxu0 0.0
    %2125 = vmatpush2.xpose.msra.mxu0 0.0
    %2126 = vmatprep.subr.mxu0 0.0
    %2127 = vmatpush2.xpose.msra.mxu0 0.0
    %2128 = vmatprep.subr.mxu0 0.0
    %2129 = vmatpush2.xpose.msra.mxu0 0.0
    %2130 = vmatprep.subr.mxu0 0.0
    %2131 = vmatpush2.xpose.msra.mxu0 0.0
    %2132 = vmatprep.subr.mxu0 0.0
    %2133 = vmatpush2.xpose.msra.mxu0 0.0
    %2134 = vmatprep.subr.mxu0 0.0
    %2135 = vmatpush2.xpose.msra.mxu0 0.0
    %2136 = vmatprep.subr.mxu0 0.0
    %2137 = vmatpush2.xpose.msra.mxu0 0.0
    %2138 = vmatprep.subr.mxu0 0.0
    %2139 = vmatpush2.xpose.msra.mxu0 0.0
    %2140 = vmatprep.subr.mxu0 0.0
    %2141 = vmatpush2.xpose.msra.mxu0 0.0
    %2142 = vmatprep.subr.mxu0 0.0
    %2143 = vmatpush2.xpose.msra.mxu0 0.0
    %2144 = vmatprep.subr.mxu0 0.0
    %2145 = vmatpush2.xpose.msra.mxu0 0.0
    %2146 = vmatprep.subr.mxu0 0.0
    %2147 = vmatpush2.xpose.msra.mxu0 0.0
    %2148 = vmatprep.subr.mxu0 0.0
    %2149 = vmatpush2.xpose.msra.mxu0 0.0
    %2150 = vmatprep.mubr.f32.mxu0 0.0
    %2151 = vmatmul.mubr.f32.gmra.mxu0 %v2015
    %v2152 = vpop.f32.mrf.mxu0
    %v2153 = vadd.f32 0.0, %v2152
    %v2154 = vpop.f32.mrf.mxu0
    %2155 = vdwg.mxu0
    %v2156 = vsel %vm128, %v2083, -inf
    %2157 = vmax.xlane.f32.xlu0 %v2156
    %v2158 = vpop.xlane.xlu0 %2157
    %v2159 = vsel %vm128, %v2153, -inf
    %2160 = vmax.xlane.f32.xlu0 %v2159
    %v2161 = vpop.xlane.xlu0 %2160
    %v2162 = vsub.f32 %v2083, %v2158
    %v2163 = vsub.f32 %v2153, %v2161
    %v2164 = vmul.f32 %v2162, 1.442695
    %v2165 = vpow.pop %v2164
    %v2166 = vmul.f32 %v2163, 1.442695
    %v2167 = vpow.pop %v2166
    %v2168 = vsel %vm128, %v2165, 0.0
    %2169 = vadd.xlane.f32.xlu0 %v2168
    %v2170 = vpop.xlane.xlu0 %2169
    %v2171 = vsel %vm128, %v2167, 0.0
    %2172 = vadd.xlane.f32.xlu0 %v2171
    %v2173 = vpop.xlane.xlu0 %2172
    %v2175 = vsel %vm128, %v2165, 0
    %2177 = vmatprep.subr.mxu0 0.0
    %2178 = vmatpush1.msra.mxu0 0.0
    %2179 = vmatprep.subr.mxu0 0.0
    %2180 = vmatpush1.msra.mxu0 0.0
    %2181 = vmatprep.subr.mxu0 0.0
    %2182 = vmatpush1.msra.mxu0 0.0
    %2183 = vmatprep.subr.mxu0 0.0
    %2184 = vmatpush1.msra.mxu0 0.0
    %2185 = vmatprep.subr.mxu0 0.0
    %2186 = vmatpush1.msra.mxu0 0.0
    %2187 = vmatprep.subr.mxu0 0.0
    %2188 = vmatpush1.msra.mxu0 0.0
    %2189 = vmatprep.subr.mxu0 0.0
    %2190 = vmatpush1.msra.mxu0 0.0
    %2191 = vmatprep.subr.mxu0 0.0
    %2192 = vmatpush1.msra.mxu0 0.0
    %2193 = vmatprep.subr.mxu0 0.0
    %2194 = vmatpush1.msra.mxu0 0.0
    %2195 = vmatprep.subr.mxu0 0.0
    %2196 = vmatpush1.msra.mxu0 0.0
    %2197 = vmatprep.subr.mxu0 0.0
    %2198 = vmatpush1.msra.mxu0 0.0
    %2199 = vmatprep.subr.mxu0 0.0
    %2200 = vmatpush1.msra.mxu0 0.0
    %2201 = vmatprep.subr.mxu0 0.0
    %2202 = vmatpush1.msra.mxu0 0.0
    %2203 = vmatprep.subr.mxu0 0.0
    %2204 = vmatpush1.msra.mxu0 0.0
    %2205 = vmatprep.subr.mxu0 0.0
    %2206 = vmatpush1.msra.mxu0 0.0
    %2207 = vmatprep.subr.mxu0 0.0
    %2208 = vmatpush1.msra.mxu0 %v2006
    %2209 = vmatprep.subr.mxu0 0.0
    %2210 = vmatpush2.msra.mxu0 0.0
    %2211 = vmatprep.subr.mxu0 0.0
    %2212 = vmatpush2.msra.mxu0 0.0
    %2213 = vmatprep.subr.mxu0 0.0
    %2214 = vmatpush2.msra.mxu0 0.0
    %2215 = vmatprep.subr.mxu0 0.0
    %2216 = vmatpush2.msra.mxu0 0.0
    %2217 = vmatprep.subr.mxu0 0.0
    %2218 = vmatpush2.msra.mxu0 0.0
    %2219 = vmatprep.subr.mxu0 0.0
    %2220 = vmatpush2.msra.mxu0 0.0
    %2221 = vmatprep.subr.mxu0 0.0
    %2222 = vmatpush2.msra.mxu0 0.0
    %2223 = vmatprep.subr.mxu0 0.0
    %2224 = vmatpush2.msra.mxu0 0.0
    %2225 = vmatprep.subr.mxu0 0.0
    %2226 = vmatpush2.msra.mxu0 0.0
    %2227 = vmatprep.subr.mxu0 0.0
    %2228 = vmatpush2.msra.mxu0 0.0
    %2229 = vmatprep.subr.mxu0 0.0
    %2230 = vmatpush2.msra.mxu0 0.0
    %2231 = vmatprep.subr.mxu0 0.0
    %2232 = vmatpush2.msra.mxu0 0.0
    %2233 = vmatprep.subr.mxu0 0.0
    %2234 = vmatpush2.msra.mxu0 0.0
    %2235 = vmatprep.subr.mxu0 0.0
    %2236 = vmatpush2.msra.mxu0 0.0
    %2237 = vmatprep.subr.mxu0 0.0
    %2238 = vmatpush2.msra.mxu0 0.0
    %2239 = vmatprep.subr.mxu0 0.0
    %2240 = vmatpush2.msra.mxu0 0.0
    %2241 = vmatprep.mubr.f32.mxu0 0.0
    %2242 = vmatmul.mubr.f32.gmra.mxu0 %v2175
    %v2243 = vpop.f32.mrf.mxu0
    %v2244 = vadd.f32 0.0, %v2243
    %v2245 = vpop.f32.mrf.mxu0
    %2246 = vdwg.mxu0
    %v2248 = vsel %vm128, %v2167, 0
    %2250 = vmatprep.subr.mxu0 0.0
    %2251 = vmatpush1.msra.mxu0 0.0
    %2252 = vmatprep.subr.mxu0 0.0
    %2253 = vmatpush1.msra.mxu0 0.0
    %2254 = vmatprep.subr.mxu0 0.0
    %2255 = vmatpush1.msra.mxu0 0.0
    %2256 = vmatprep.subr.mxu0 0.0
    %2257 = vmatpush1.msra.mxu0 0.0
    %2258 = vmatprep.subr.mxu0 0.0
    %2259 = vmatpush1.msra.mxu0 0.0
    %2260 = vmatprep.subr.mxu0 0.0
    %2261 = vmatpush1.msra.mxu0 0.0
    %2262 = vmatprep.subr.mxu0 0.0
    %2263 = vmatpush1.msra.mxu0 0.0
    %2264 = vmatprep.subr.mxu0 0.0
    %2265 = vmatpush1.msra.mxu0 0.0
    %2266 = vmatprep.subr.mxu0 0.0
    %2267 = vmatpush1.msra.mxu0 0.0
    %2268 = vmatprep.subr.mxu0 0.0
    %2269 = vmatpush1.msra.mxu0 0.0
    %2270 = vmatprep.subr.mxu0 0.0
    %2271 = vmatpush1.msra.mxu0 0.0
    %2272 = vmatprep.subr.mxu0 0.0
    %2273 = vmatpush1.msra.mxu0 0.0
    %2274 = vmatprep.subr.mxu0 0.0
    %2275 = vmatpush1.msra.mxu0 0.0
    %2276 = vmatprep.subr.mxu0 0.0
    %2277 = vmatpush1.msra.mxu0 0.0
    %2278 = vmatprep.subr.mxu0 0.0
    %2279 = vmatpush1.msra.mxu0 0.0
    %2280 = vmatprep.subr.mxu0 0.0
    %2281 = vmatpush1.msra.mxu0 %v2011
    %2282 = vmatprep.subr.mxu0 0.0
    %2283 = vmatpush2.msra.mxu0 0.0
    %2284 = vmatprep.subr.mxu0 0.0
    %2285 = vmatpush2.msra.mxu0 0.0
    %2286 = vmatprep.subr.mxu0 0.0
    %2287 = vmatpush2.msra.mxu0 0.0
    %2288 = vmatprep.subr.mxu0 0.0
    %2289 = vmatpush2.msra.mxu0 0.0
    %2290 = vmatprep.subr.mxu0 0.0
    %2291 = vmatpush2.msra.mxu0 0.0
    %2292 = vmatprep.subr.mxu0 0.0
    %2293 = vmatpush2.msra.mxu0 0.0
    %2294 = vmatprep.subr.mxu0 0.0
    %2295 = vmatpush2.msra.mxu0 0.0
    %2296 = vmatprep.subr.mxu0 0.0
    %2297 = vmatpush2.msra.mxu0 0.0
    %2298 = vmatprep.subr.mxu0 0.0
    %2299 = vmatpush2.msra.mxu0 0.0
    %2300 = vmatprep.subr.mxu0 0.0
    %2301 = vmatpush2.msra.mxu0 0.0
    %2302 = vmatprep.subr.mxu0 0.0
    %2303 = vmatpush2.msra.mxu0 0.0
    %2304 = vmatprep.subr.mxu0 0.0
    %2305 = vmatpush2.msra.mxu0 0.0
    %2306 = vmatprep.subr.mxu0 0.0
    %2307 = vmatpush2.msra.mxu0 0.0
    %2308 = vmatprep.subr.mxu0 0.0
    %2309 = vmatpush2.msra.mxu0 0.0
    %2310 = vmatprep.subr.mxu0 0.0
    %2311 = vmatpush2.msra.mxu0 0.0
    %2312 = vmatprep.subr.mxu0 0.0
    %2313 = vmatpush2.msra.mxu0 0.0
    %2314 = vmatprep.mubr.f32.mxu0 0.0
    %2315 = vmatmul.mubr.f32.gmra.mxu0 %v2248
    %v2316 = vpop.f32.mrf.mxu0
    %v2317 = vadd.f32 0.0, %v2316
    %v2318 = vpop.f32.mrf.mxu0
    %2319 = vdwg.mxu0
    %v2320 = vrcp.pop %v2170
    %v2321 = vrcp.pop %v2173
    %v2322 = vmul.f32 %v2244, %v2320
    %v2323 = vmul.f32 %v2317, %v2321
    %v2324 = vld [vmem:[#allocation11] sm:$0xff]
    %v2325 = vld [vmem:[#allocation11 + $0x8] sm:$0xff]
    %v2326 = vld [vmem:[#allocation11 + $0x10] sm:$0xff]
    %v2327 = vld [vmem:[#allocation11 + $0x18] sm:$0xff]
    %v2328 = vld [vmem:[#allocation11 + $0x20] sm:$0xff]
    %v2329 = vld [vmem:[#allocation11 + $0x28] sm:$0xff]
    %v2330 = vld [vmem:[#allocation11 + $0x30] sm:$0xff]
    %v2331 = vld [vmem:[#allocation11 + $0x38] sm:$0xff]
    %v2332 = vld [vmem:[#allocation11 + $0x40] sm:$0xff]
    %v2333 = vld [vmem:[#allocation11 + $0x48] sm:$0xff]
    %v2334 = vld [vmem:[#allocation11 + $0x50] sm:$0xff]
    %v2335 = vld [vmem:[#allocation11 + $0x58] sm:$0xff]
    %v2336 = vld [vmem:[#allocation11 + $0x60] sm:$0xff]
    %v2337 = vld [vmem:[#allocation11 + $0x68] sm:$0xff]
    %v2338 = vld [vmem:[#allocation11 + $0x70] sm:$0xff]
    %v2339 = vld [vmem:[#allocation11 + $0x78] sm:$0xff]
    %v2340 = vld [vmem:[%s6] sm:$0x1]
    %v2342 = vlaneseq
    %v2343 = vshrl.u32 %v2342, 7
    %v2344 = vsub.s32 0, %v2343
    %v2345 = vrot.slane %v2340, %v2344
    %2347 = vmatprep.subr.mxu0 0.0
    %2348 = vmatpush1.msra.mxu0 %v2339
    %2349 = vmatprep.subr.mxu0 0.0
    %2350 = vmatpush1.msra.mxu0 %v2338
    %2351 = vmatprep.subr.mxu0 0.0
    %2352 = vmatpush1.msra.mxu0 %v2337
    %2353 = vmatprep.subr.mxu0 0.0
    %2354 = vmatpush1.msra.mxu0 %v2336
    %2355 = vmatprep.subr.mxu0 0.0
    %2356 = vmatpush1.msra.mxu0 %v2335
    %2357 = vmatprep.subr.mxu0 0.0
    %2358 = vmatpush1.msra.mxu0 %v2334
    %2359 = vmatprep.subr.mxu0 0.0
    %2360 = vmatpush1.msra.mxu0 %v2333
    %2361 = vmatprep.subr.mxu0 0.0
    %2362 = vmatpush1.msra.mxu0 %v2332
    %2363 = vmatprep.subr.mxu0 0.0
    %2364 = vmatpush1.msra.mxu0 %v2331
    %2365 = vmatprep.subr.mxu0 0.0
    %2366 = vmatpush1.msra.mxu0 %v2330
    %2367 = vmatprep.subr.mxu0 0.0
    %2368 = vmatpush1.msra.mxu0 %v2329
    %2369 = vmatprep.subr.mxu0 0.0
    %2370 = vmatpush1.msra.mxu0 %v2328
    %2371 = vmatprep.subr.mxu0 0.0
    %2372 = vmatpush1.msra.mxu0 %v2327
    %2373 = vmatprep.subr.mxu0 0.0
    %2374 = vmatpush1.msra.mxu0 %v2326
    %2375 = vmatprep.subr.mxu0 0.0
    %2376 = vmatpush1.msra.mxu0 %v2325
    %2377 = vmatprep.subr.mxu0 0.0
    %2378 = vmatpush1.msra.mxu0 %v2324
    %2379 = vmatprep.subr.mxu0 0.0
    %2380 = vmatpush2.msra.mxu0 0.0
    %2381 = vmatprep.subr.mxu0 0.0
    %2382 = vmatpush2.msra.mxu0 0.0
    %2383 = vmatprep.subr.mxu0 0.0
    %2384 = vmatpush2.msra.mxu0 0.0
    %2385 = vmatprep.subr.mxu0 0.0
    %2386 = vmatpush2.msra.mxu0 0.0
    %2387 = vmatprep.subr.mxu0 0.0
    %2388 = vmatpush2.msra.mxu0 0.0
    %2389 = vmatprep.subr.mxu0 0.0
    %2390 = vmatpush2.msra.mxu0 0.0
    %2391 = vmatprep.subr.mxu0 0.0
    %2392 = vmatpush2.msra.mxu0 0.0
    %2393 = vmatprep.subr.mxu0 0.0
    %2394 = vmatpush2.msra.mxu0 0.0
    %2395 = vmatprep.subr.mxu0 0.0
    %2396 = vmatpush2.msra.mxu0 0.0
    %2397 = vmatprep.subr.mxu0 0.0
    %2398 = vmatpush2.msra.mxu0 0.0
    %2399 = vmatprep.subr.mxu0 0.0
    %2400 = vmatpush2.msra.mxu0 0.0
    %2401 = vmatprep.subr.mxu0 0.0
    %2402 = vmatpush2.msra.mxu0 0.0
    %2403 = vmatprep.subr.mxu0 0.0
    %2404 = vmatpush2.msra.mxu0 0.0
    %2405 = vmatprep.subr.mxu0 0.0
    %2406 = vmatpush2.msra.mxu0 0.0
    %2407 = vmatprep.subr.mxu0 0.0
    %2408 = vmatpush2.msra.mxu0 0.0
    %2409 = vmatprep.subr.mxu0 0.0
    %2410 = vmatpush2.msra.mxu0 0.0
    %2411 = vmatprep.mubr.f32.mxu0 0.0
    %2412 = vmatmul.mubr.f32.gmra.mxu0 %v2322
    %v2413 = vpop.f32.mrf.mxu0
    %v2414 = vadd.f32 %v2345, %v2413
    %v2415 = vpop.f32.mrf.mxu0
    %2416 = vmatprep.mubr.f32.mxu0 0.0
    %2417 = vmatmul.mubr.f32.gmra.mxu0 %v2323
    %v2418 = vpop.f32.mrf.mxu0
    %v2419 = vadd.f32 %v2345, %v2418
    %v2420 = vpop.f32.mrf.mxu0
    %2421 = vdwg.mxu0
    %2422 = vmax.xlane.f32.xlu0 %v2414
    %v2423 = vpop.xlane.xlu0 %2422
    %2424 = vmax.xlane.f32.xlu0 %v2419
    %v2425 = vpop.xlane.xlu0 %2424
    %v2426 = vsub.f32 %v2414, %v2423
    %v2427 = vsub.f32 %v2419, %v2425
    %v2428 = vmul.f32 %v2426, 1.442695
    %v2429 = vpow.pop %v2428
    %v2430 = vmul.f32 %v2427, 1.442695
    %v2431 = vpow.pop %v2430
    %2432 = vadd.xlane.f32.xlu0 %v2429
    %v2433 = vpop.xlane.xlu0 %2432
    %2434 = vadd.xlane.f32.xlu0 %v2431
    %v2435 = vpop.xlane.xlu0 %2434
    %v2436 = vlog2.pop %v2433
    %v2437 = vmul.f32 %v2436, 0.6931472
    %v2438 = vlog2.pop %v2435
    %v2439 = vmul.f32 %v2438, 0.6931472
    %v2440 = vsub.f32 %v2426, %v2437
    %v2441 = vsub.f32 %v2427, %v2439
    %2442 = vst [vmem:[#allocation13] sm:$0xff] %v2440
    %2443 = vst [vmem:[#allocation13 + $0x8] sm:$0xff] %v2441
    // Predicated region
    $region54: #{tpu_custom_call.1} parent=1 // pred_check
      _
    $region55: #{tpu_custom_call.1} parent=1 // pred_check_branch
      %2445 = sbr.rel (0) target = $region57
    $region56: #{tpu_custom_call.1} parent=1 // pred_region
      %s2447 = ssub.s32 256, 256
      %2448 = vsyncadd [#allocation4], %s2447
      %s2449 = sshll.u32 [#allocation13], 4
      %s2450 = int_to_ptr.vmem [resolvable:$true] %s2449
      %2455 = dma.vmem_to_hbm [thread:$0]  %s2450, 256, %s7, [#allocation4], 128, 128, 8
    $region57: #{tpu_custom_call.1} parent=1 // pred_fallthru
      _
    // Predicated region
    $region58: #{tpu_custom_call.1} parent=1 // pred_check
      _
    $region59: #{tpu_custom_call.1} parent=1 // pred_check_branch
      %2457 = sbr.rel (0) target = $region61
    $region60: #{tpu_custom_call.1} parent=1 // pred_region
      %2458 = dma.done [#allocation4], 256
    $region61: #{tpu_custom_call.1} parent=1 // pred_fallthru
      _
    %2459 = vsyncpa [#allocation3], 1
    %2460 = vsyncpa [#allocation6], 1
    %2461 = vsyncpa [#allocation9], 1
    %2462 = vsyncpa [#allocation12], 1
    %2463 = vsyncpa [#allocation4], 1

</llo_original>
